<compile_context>
chip_gen: v5e
topology: v5e:2x2
jax: 0.10.0
libtpu: 0.0.40
codegen_flags: <defaults>
</compile_context>

<pallas_src>
import functools

import jax
import jax.numpy as jnp
from jax.experimental import pallas as pl
from jax.experimental.pallas import tpu as pltpu

N_FEATURES = 32
H1 = 500          # logical widths (PyTorch module)
H2 = 250
H1_PAD = 512      # lane-padded widths used by the kernel
H2_PAD = 256
EPS = 1e-5


def _round_up(a, m):
    return (a + m - 1) // m * m


def mlp_kernel(x_ref,
               w1_ref, b1_ref, g1_ref, be1_ref,
               w2_ref, b2_ref, g2_ref, be2_ref,
               w3_ref, b3_ref,
               o_ref,
               sum1, ss1, sum2, ss2, sc1, sh1, sc2, sh2,
               *, batch, tile_b):
    phase = pl.program_id(0)          # 0: BN1 stats, 1: BN2 stats, 2: apply/output
    tile = pl.program_id(1)           # batch tile index
    last_tile = pl.num_programs(1) - 1
    inv_b = 1.0 / float(batch)        # full-batch denominator (biased variance)

    # Zero the cross-tile statistics accumulators at the very first grid step.
    @pl.when((phase == 0) & (tile == 0))
    def _():
        sum1[...] = jnp.zeros_like(sum1)
        ss1[...] = jnp.zeros_like(ss1)
        sum2[...] = jnp.zeros_like(sum2)
        ss2[...] = jnp.zeros_like(ss2)

    # Row-validity mask: padded batch rows must not pollute the BN statistics.
    row = tile * tile_b + jax.lax.broadcasted_iota(jnp.int32, (tile_b, 1), 0)
    mask = (row < batch).astype(jnp.float32)

    # l1: Linear(32 -> 500[512]) + l2: ReLU  (recomputed every phase; cheaper
    # than storing the (B,512) f32 activation to HBM between phases)
    h1 = jnp.dot(x_ref[...].astype(jnp.bfloat16), w1_ref[...],
                 preferred_element_type=jnp.float32) + b1_ref[...]
    h1 = jnp.maximum(h1, 0.0)

    # ---- phase 0: accumulate BN1 batch statistics (sum, sum-of-squares) ----
    @pl.when(phase == 0)
    def _():
        hm = h1 * mask
        sum1[...] += jnp.sum(hm, axis=0, keepdims=True)
        ss1[...] += jnp.sum(hm * h1, axis=0, keepdims=True)
        o_ref[...] = jnp.zeros_like(o_ref)   # deterministic placeholder write

    @pl.when((phase == 0) & (tile == last_tile))
    def _():
        # One-pass variance (E[x^2]-E[x]^2) in f32 with a >=0 clamp.
        # TODO(synk): switch to two-pass/Welford if cancellation ever matters.
        mu = sum1[...] * inv_b
        var = jnp.maximum(ss1[...] * inv_b - mu * mu, 0.0)
        s = g1_ref[...] * jax.lax.rsqrt(var + EPS)
        sc1[...] = s
        sh1[...] = be1_ref[...] - mu * s

    # ---- phase 1: apply BN1, run layer 2, accumulate BN2 statistics --------
    @pl.when(phase == 1)
    def _():
        h1n = h1 * sc1[...] + sh1[...]
        h2 = jnp.dot(h1n.astype(jnp.bfloat16), w2_ref[...],
                     preferred_element_type=jnp.float32) + b2_ref[...]
        h2 = jnp.maximum(h2, 0.0)
        hm2 = h2 * mask
        sum2[...] += jnp.sum(hm2, axis=0, keepdims=True)
        ss2[...] += jnp.sum(hm2 * h2, axis=0, keepdims=True)
        o_ref[...] = jnp.zeros_like(o_ref)

    @pl.when((phase == 1) & (tile == last_tile))
    def _():
        mu2 = sum2[...] * inv_b
        var2 = jnp.maximum(ss2[...] * inv_b - mu2 * mu2, 0.0)
        s2 = g2_ref[...] * jax.lax.rsqrt(var2 + EPS)
        sc2[...] = s2
        sh2[...] = be2_ref[...] - mu2 * s2

    # ---- phase 2: apply BN1/BN2, final Linear(250->1) + Sigmoid, write out --
    @pl.when(phase == 2)
    def _():
        h1n = h1 * sc1[...] + sh1[...]
        h2 = jnp.dot(h1n.astype(jnp.bfloat16), w2_ref[...],
                     preferred_element_type=jnp.float32) + b2_ref[...]
        h2 = jnp.maximum(h2, 0.0)
        h2n = h2 * sc2[...] + sh2[...]
        # Single real output column: VPU multiply + lane reduction (no 128x-
        # padded MXU dot, no wasted sigmoid/EUP work, 4 B/row writeback).
        logit = jnp.sum(h2n * w3_ref[...], axis=-1, keepdims=True) + b3_ref[...]
        o_ref[...] = jax.nn.sigmoid(logit)


def mlp_forward(x, params, *, tile_b=512):
    batch = x.shape[0]
    # Batch tile: multiple of 16 (bf16 LHS sublane packing), capped at tile_b.
    tb = min(tile_b, _round_up(batch, 16))
    b_pad = _round_up(batch, tb)
    if b_pad != batch:
        x = jnp.pad(x, ((0, b_pad - batch), (0, 0)))
    num_tiles = b_pad // tb

    def const_spec(a):
        # Constant block index -> DMA'd once, VMEM-resident across all tiles.
        return pl.BlockSpec(a.shape, lambda p, t: (0, 0))

    in_specs = [pl.BlockSpec((tb, N_FEATURES), lambda p, t: (t, 0))]
    in_specs += [const_spec(a) for a in params]
    out_spec = pl.BlockSpec((tb, 1), lambda p, t: (t, 0))

    flops_per_row = (3 * 2 * N_FEATURES * H1_PAD       # layer1 runs in 3 phases
                     + 2 * 2 * H1_PAD * H2_PAD         # layer2 runs in 2 phases
                     + 2 * H2_PAD)                     # layer3 (VPU) once
    cost = pl.CostEstimate(
        flops=b_pad * flops_per_row,
        transcendentals=b_pad + H1_PAD + H2_PAD,       # sigmoid + rsqrt rows
        bytes_accessed=(3 * int(x.size) * x.dtype.itemsize
                        + sum(int(p.size) * p.dtype.itemsize for p in params)
                        + b_pad * 4),
    )

    out = pl.pallas_call(
        functools.partial(mlp_kernel, batch=batch, tile_b=tb),
        out_shape=jax.ShapeDtypeStruct((b_pad, 1), jnp.float32),
        grid=(3, num_tiles),
        in_specs=in_specs,
        out_specs=out_spec,
        scratch_shapes=[
            pltpu.VMEM((1, H1_PAD), jnp.float32),  # sum1
            pltpu.VMEM((1, H1_PAD), jnp.float32),  # sum-of-squares 1
            pltpu.VMEM((1, H2_PAD), jnp.float32),  # sum2
            pltpu.VMEM((1, H2_PAD), jnp.float32),  # sum-of-squares 2
            pltpu.VMEM((1, H1_PAD), jnp.float32),  # BN1 scale
            pltpu.VMEM((1, H1_PAD), jnp.float32),  # BN1 shift
            pltpu.VMEM((1, H2_PAD), jnp.float32),  # BN2 scale
            pltpu.VMEM((1, H2_PAD), jnp.float32),  # BN2 shift
        ],
        compiler_params=pltpu.CompilerParams(
            # Both axes must stay 'arbitrary': phase is a sequential dependency
            # (stats -> finalize -> apply) and batch tiles share the BN stats
            # scratch, so megacore sharding would split the statistics.
            dimension_semantics=("arbitrary", "arbitrary"),
            # Comfortably under v7x's ~48 MiB usable scoped VMEM; explicitly
            # above v5e's 16 MiB scoped default.
            vmem_limit_bytes=32 * 1024 * 1024,
        ),
        cost_estimate=cost,
    )(x, *params)
    # Only the first `batch` rows are real (padded rows were masked / discarded).
    return out[:batch]


def init_params(key):
    """PyTorch Linear default init (U(-1/sqrt(fan_in), +bound)); BatchNorm
    gamma=1 / beta=0.  w1/w2 stored pre-transposed as (in, out), zero-padded to
    lane-friendly widths, cast to bfloat16.  The final layer's single output
    column is stored as an f32 row vector (1, H2_PAD) for the VPU reduction."""
    ks = jax.random.split(key, 6)

    def linear_wt(kw, kb, fan_in, fan_out, in_pad, out_pad):
        bound = 1.0 / jnp.sqrt(float(fan_in))
        w = jax.random.uniform(kw, (fan_in, fan_out), jnp.float32, -bound, bound)
        b = jax.random.uniform(kb, (1, fan_out), jnp.float32, -bound, bound)
        w = jnp.pad(w, ((0, in_pad - fan_in), (0, out_pad - fan_out)))
        b = jnp.pad(b, ((0, 0), (0, out_pad - fan_out)))
        return w.astype(jnp.bfloat16), b

    w1, b1 = linear_wt(ks[0], ks[1], N_FEATURES, H1, N_FEATURES, H1_PAD)
    w2, b2 = linear_wt(ks[2], ks[3], H1, H2, H1_PAD, H2_PAD)

    bound3 = 1.0 / jnp.sqrt(float(H2))
    w3 = jax.random.uniform(ks[4], (1, H2), jnp.float32, -bound3, bound3)
    w3 = jnp.pad(w3, ((0, 0), (0, H2_PAD - H2)))               # (1, 256) f32
    b3 = jax.random.uniform(ks[5], (1, 1), jnp.float32, -bound3, bound3)

    # gamma = 1 on real features, 0 on padding (keeps padded columns at exactly 0)
    g1 = jnp.pad(jnp.ones((1, H1), jnp.float32), ((0, 0), (0, H1_PAD - H1)))
    be1 = jnp.zeros((1, H1_PAD), jnp.float32)
    g2 = jnp.pad(jnp.ones((1, H2), jnp.float32), ((0, 0), (0, H2_PAD - H2)))
    be2 = jnp.zeros((1, H2_PAD), jnp.float32)

    return (w1, b1, g1, be1, w2, b2, g2, be2, w3, b3)


def _reference_forward(x, params):
    """Pure-JAX f32 reference (same padded params, training-mode BatchNorm)."""
    (w1, b1, g1, be1, w2, b2, g2, be2, w3, b3) = params

    def bn(h, g, b):
        mu = jnp.mean(h, axis=0, keepdims=True)
        var = jnp.mean((h - mu) ** 2, axis=0, keepdims=True)
        return (h - mu) * jax.lax.rsqrt(var + EPS) * g + b

    h = jnp.maximum(x @ w1.astype(jnp.float32) + b1, 0.0)
    h = bn(h, g1, be1)
    h = jnp.maximum(h @ w2.astype(jnp.float32) + b2, 0.0)
    h = bn(h, g2, be2)
    logit = jnp.sum(h * w3, axis=-1, keepdims=True) + b3
    return jax.nn.sigmoid(logit)


if __name__ == "__main__":
    key = jax.random.PRNGKey(0)
    k_x, k_p = jax.random.split(key)

    batch = 8
    x = jax.random.normal(k_x, (batch, N_FEATURES), jnp.float32)
    params = init_params(k_p)

    out = mlp_forward(x, params)
    out = jax.block_until_ready(out)

    assert out.shape == (batch, 1)
    assert out.dtype == jnp.float32
    assert bool(jnp.all((out > 0.0) & (out < 1.0)))

    # Loose check against the f32 reference (bf16 matmul inputs in the kernel).
    ref = _reference_forward(x, params)
    assert bool(jnp.all(jnp.abs(out - ref) < 5e-2))

    print("KERNEL_OK")
</pallas_src>

<mosaic_0001>
module attributes {stable_mosaic.version = 11 : i64} {
  func.func @mlp_kernel(%arg0: i32, %arg1: i32, %arg2: memref<16x32xf32, #tpu.memory_space<vmem>>, %arg3: memref<32x512xbf16, #tpu.memory_space<vmem>>, %arg4: memref<1x512xf32, #tpu.memory_space<vmem>>, %arg5: memref<1x512xf32, #tpu.memory_space<vmem>>, %arg6: memref<1x512xf32, #tpu.memory_space<vmem>>, %arg7: memref<512x256xbf16, #tpu.memory_space<vmem>>, %arg8: memref<1x256xf32, #tpu.memory_space<vmem>>, %arg9: memref<1x256xf32, #tpu.memory_space<vmem>>, %arg10: memref<1x256xf32, #tpu.memory_space<vmem>>, %arg11: memref<1x256xf32, #tpu.memory_space<vmem>>, %arg12: memref<1x1xf32, #tpu.memory_space<vmem>>, %arg13: memref<16x1xf32, #tpu.memory_space<vmem>>, %arg14: memref<1x512xf32, #tpu.memory_space<vmem>>, %arg15: memref<1x512xf32, #tpu.memory_space<vmem>>, %arg16: memref<1x256xf32, #tpu.memory_space<vmem>>, %arg17: memref<1x256xf32, #tpu.memory_space<vmem>>, %arg18: memref<1x512xf32, #tpu.memory_space<vmem>>, %arg19: memref<1x512xf32, #tpu.memory_space<vmem>>, %arg20: memref<1x256xf32, #tpu.memory_space<vmem>>, %arg21: memref<1x256xf32, #tpu.memory_space<vmem>>) attributes {dimension_semantics = [#tpu.dimension_semantics<arbitrary>, #tpu.dimension_semantics<arbitrary>], iteration_bounds = array<i64: 3, 1>, scalar_prefetch = 0 : i64, scratch_operands = 8 : i64, tpu.core_type = #tpu.core_type<tc>, window_params = [{transform_indices = @transform_0, window_bounds = array<i64: 16, 32>}, {pipeline_mode = #tpu.pipeline_mode<synchronous>, transform_indices = @transform_1, window_bounds = array<i64: 32, 512>}, {pipeline_mode = #tpu.pipeline_mode<synchronous>, transform_indices = @transform_2, window_bounds = array<i64: 1, 512>}, {pipeline_mode = #tpu.pipeline_mode<synchronous>, transform_indices = @transform_3, window_bounds = array<i64: 1, 512>}, {pipeline_mode = #tpu.pipeline_mode<synchronous>, transform_indices = @transform_4, window_bounds = array<i64: 1, 512>}, {pipeline_mode = #tpu.pipeline_mode<synchronous>, transform_indices = @transform_5, window_bounds = array<i64: 512, 256>}, {pipeline_mode = #tpu.pipeline_mode<synchronous>, transform_indices = @transform_6, window_bounds = array<i64: 1, 256>}, {pipeline_mode = #tpu.pipeline_mode<synchronous>, transform_indices = @transform_7, window_bounds = array<i64: 1, 256>}, {pipeline_mode = #tpu.pipeline_mode<synchronous>, transform_indices = @transform_8, window_bounds = array<i64: 1, 256>}, {pipeline_mode = #tpu.pipeline_mode<synchronous>, transform_indices = @transform_9, window_bounds = array<i64: 1, 256>}, {pipeline_mode = #tpu.pipeline_mode<synchronous>, transform_indices = @transform_10, window_bounds = array<i64: 1, 1>}, {transform_indices = @transform_11, window_bounds = array<i64: 16, 1>}]} {
    %c0_i32 = arith.constant 0 : i32
    %0 = arith.cmpi eq, %arg0, %c0_i32 : i32
    %c0_i32_0 = arith.constant 0 : i32
    %1 = arith.cmpi eq, %arg1, %c0_i32_0 : i32
    %2 = arith.andi %0, %1 : i1
    %3 = arith.extui %2 : i1 to i32
    %c0_i32_1 = arith.constant 0 : i32
    %4 = arith.cmpi ne, %3, %c0_i32_1 : i32
    scf.if %4 {
      %cst_18 = arith.constant 0.000000e+00 : f32
      %41 = vector.broadcast %cst_18 : f32 to vector<1x512xf32>
      %c0_19 = arith.constant 0 : index
      %c0_20 = arith.constant 0 : index
      %42 = vector.load %arg14[%c0_19, %c0_20] : memref<1x512xf32, #tpu.memory_space<vmem>>, vector<1x512xf32>
      tpu.vector_store %arg14[%c0_19, %c0_20], %41 {strides = array<i32>} : memref<1x512xf32, #tpu.memory_space<vmem>>, vector<1x512xf32>,
      %cst_21 = arith.constant 0.000000e+00 : f32
      %43 = vector.broadcast %cst_21 : f32 to vector<1x512xf32>
      %c0_22 = arith.constant 0 : index
      %c0_23 = arith.constant 0 : index
      %44 = vector.load %arg15[%c0_22, %c0_23] : memref<1x512xf32, #tpu.memory_space<vmem>>, vector<1x512xf32>
      tpu.vector_store %arg15[%c0_22, %c0_23], %43 {strides = array<i32>} : memref<1x512xf32, #tpu.memory_space<vmem>>, vector<1x512xf32>,
      %cst_24 = arith.constant 0.000000e+00 : f32
      %45 = vector.broadcast %cst_24 : f32 to vector<1x256xf32>
      %c0_25 = arith.constant 0 : index
      %c0_26 = arith.constant 0 : index
      %46 = vector.load %arg16[%c0_25, %c0_26] : memref<1x256xf32, #tpu.memory_space<vmem>>, vector<1x256xf32>
      tpu.vector_store %arg16[%c0_25, %c0_26], %45 {strides = array<i32>} : memref<1x256xf32, #tpu.memory_space<vmem>>, vector<1x256xf32>,
      %cst_27 = arith.constant 0.000000e+00 : f32
      %47 = vector.broadcast %cst_27 : f32 to vector<1x256xf32>
      %c0_28 = arith.constant 0 : index
      %c0_29 = arith.constant 0 : index
      %48 = vector.load %arg17[%c0_28, %c0_29] : memref<1x256xf32, #tpu.memory_space<vmem>>, vector<1x256xf32>
      tpu.vector_store %arg17[%c0_28, %c0_29], %47 {strides = array<i32>} : memref<1x256xf32, #tpu.memory_space<vmem>>, vector<1x256xf32>,
    } else {
    }
    %c16_i32 = arith.constant 16 : i32
    %5 = arith.muli %arg1, %c16_i32 : i32
    %6 = tpu.iota {dimensions = array<i32: 0>} : vector<16x1xi32>
    %7 = vector.broadcast %5 : i32 to vector<16x1xi32>
    %8 = arith.addi %7, %6 : vector<16x1xi32>
    %c8_i32 = arith.constant 8 : i32
    %9 = vector.broadcast %c8_i32 : i32 to vector<16x1xi32>
    %10 = arith.cmpi slt, %8, %9 : vector<16x1xi32>
    %11 = arith.extui %10 : vector<16x1xi1> to vector<16x1xi32>
    %12 = arith.sitofp %11 : vector<16x1xi32> to vector<16x1xf32>
    %c0 = arith.constant 0 : index
    %c0_2 = arith.constant 0 : index
    %13 = vector.load %arg2[%c0, %c0_2] : memref<16x32xf32, #tpu.memory_space<vmem>>, vector<16x32xf32>
    %14 = arith.truncf %13 : vector<16x32xf32> to vector<16x32xbf16>
    %c0_3 = arith.constant 0 : index
    %c0_4 = arith.constant 0 : index
    %15 = vector.load %arg3[%c0_3, %c0_4] : memref<32x512xbf16, #tpu.memory_space<vmem>>, vector<32x512xbf16>
    %cst = arith.constant dense<0.000000e+00> : vector<16x512xf32>
    %16 = tpu.matmul %14, %15, %cst {dimension_numbers = #tpu.dot_dimension_numbers<[1], [0], [0], [1], [0, 0, 1, 1], [], []>} : vector<16x32xbf16>, vector<32x512xbf16>, vector<16x512xf32> -> vector<16x512xf32>
    %c0_5 = arith.constant 0 : index
    %c0_6 = arith.constant 0 : index
    %17 = vector.load %arg4[%c0_5, %c0_6] : memref<1x512xf32, #tpu.memory_space<vmem>>, vector<1x512xf32>
    %18 = vector.broadcast %17 : vector<1x512xf32> to vector<16x512xf32>
    %19 = arith.addf %16, %18 : vector<16x512xf32>
    %cst_7 = arith.constant 0.000000e+00 : f32
    %20 = vector.broadcast %cst_7 : f32 to vector<16x512xf32>
    %21 = arith.maximumf %19, %20 : vector<16x512xf32>
    %c0_i32_8 = arith.constant 0 : i32
    %22 = arith.cmpi eq, %arg0, %c0_i32_8 : i32
    %23 = arith.extui %22 : i1 to i32
    %c0_i32_9 = arith.constant 0 : i32
    %24 = arith.cmpi ne, %23, %c0_i32_9 : i32
    scf.if %24 {
      %41 = vector.broadcast %12 : vector<16x1xf32> to vector<16x512xf32>
      %42 = arith.mulf %21, %41 : vector<16x512xf32>
      %c0_18 = arith.constant 0 : index
      %c0_19 = arith.constant 0 : index
      %43 = vector.load %arg14[%c0_18, %c0_19] : memref<1x512xf32, #tpu.memory_space<vmem>>, vector<1x512xf32>
      %cst_20 = arith.constant dense<0.000000e+00> : vector<512xf32>
      %44 = vector.multi_reduction <add>, %42, %cst_20 [0] : vector<16x512xf32> to vector<512xf32>
      %45 = vector.shape_cast %44 : vector<512xf32> to vector<1x512xf32>
      %46 = arith.addf %43, %45 : vector<1x512xf32>
      %c0_21 = arith.constant 0 : index
      %c0_22 = arith.constant 0 : index
      %47 = vector.load %arg14[%c0_21, %c0_22] : memref<1x512xf32, #tpu.memory_space<vmem>>, vector<1x512xf32>
      tpu.vector_store %arg14[%c0_21, %c0_22], %46 {strides = array<i32>} : memref<1x512xf32, #tpu.memory_space<vmem>>, vector<1x512xf32>,
      %c0_23 = arith.constant 0 : index
      %c0_24 = arith.constant 0 : index
      %48 = vector.load %arg15[%c0_23, %c0_24] : memref<1x512xf32, #tpu.memory_space<vmem>>, vector<1x512xf32>
      %49 = arith.mulf %42, %21 : vector<16x512xf32>
      %cst_25 = arith.constant dense<0.000000e+00> : vector<512xf32>
      %50 = vector.multi_reduction <add>, %49, %cst_25 [0] : vector<16x512xf32> to vector<512xf32>
      %51 = vector.shape_cast %50 : vector<512xf32> to vector<1x512xf32>
      %52 = arith.addf %48, %51 : vector<1x512xf32>
      %c0_26 = arith.constant 0 : index
      %c0_27 = arith.constant 0 : index
      %53 = vector.load %arg15[%c0_26, %c0_27] : memref<1x512xf32, #tpu.memory_space<vmem>>, vector<1x512xf32>
      tpu.vector_store %arg15[%c0_26, %c0_27], %52 {strides = array<i32>} : memref<1x512xf32, #tpu.memory_space<vmem>>, vector<1x512xf32>,
      %cst_28 = arith.constant 0.000000e+00 : f32
      %54 = vector.broadcast %cst_28 : f32 to vector<16x1xf32>
      %c0_29 = arith.constant 0 : index
      %c0_30 = arith.constant 0 : index
      %55 = vector.load %arg13[%c0_29, %c0_30] : memref<16x1xf32, #tpu.memory_space<vmem>>, vector<16x1xf32>
      tpu.vector_store %arg13[%c0_29, %c0_30], %54 {strides = array<i32>} : memref<16x1xf32, #tpu.memory_space<vmem>>, vector<16x1xf32>,
    } else {
    }
    %c0_i32_10 = arith.constant 0 : i32
    %25 = arith.cmpi eq, %arg0, %c0_i32_10 : i32
    %c0_i32_11 = arith.constant 0 : i32
    %26 = arith.cmpi eq, %arg1, %c0_i32_11 : i32
    %27 = arith.andi %25, %26 : i1
    %28 = arith.extui %27 : i1 to i32
    %c0_i32_12 = arith.constant 0 : i32
    %29 = arith.cmpi ne, %28, %c0_i32_12 : i32
    scf.if %29 {
      %c0_18 = arith.constant 0 : index
      %c0_19 = arith.constant 0 : index
      %41 = vector.load %arg14[%c0_18, %c0_19] : memref<1x512xf32, #tpu.memory_space<vmem>>, vector<1x512xf32>
      %cst_20 = arith.constant 1.250000e-01 : f32
      %42 = vector.broadcast %cst_20 : f32 to vector<1x512xf32>
      %43 = arith.mulf %41, %42 : vector<1x512xf32>
      %c0_21 = arith.constant 0 : index
      %c0_22 = arith.constant 0 : index
      %44 = vector.load %arg15[%c0_21, %c0_22] : memref<1x512xf32, #tpu.memory_space<vmem>>, vector<1x512xf32>
      %cst_23 = arith.constant 1.250000e-01 : f32
      %45 = vector.broadcast %cst_23 : f32 to vector<1x512xf32>
      %46 = arith.mulf %44, %45 : vector<1x512xf32>
      %47 = arith.mulf %43, %43 : vector<1x512xf32>
      %48 = arith.subf %46, %47 : vector<1x512xf32>
      %cst_24 = arith.constant 0.000000e+00 : f32
      %49 = vector.broadcast %cst_24 : f32 to vector<1x512xf32>
      %50 = arith.maximumf %48, %49 : vector<1x512xf32>
      %c0_25 = arith.constant 0 : index
      %c0_26 = arith.constant 0 : index
      %51 = vector.load %arg5[%c0_25, %c0_26] : memref<1x512xf32, #tpu.memory_space<vmem>>, vector<1x512xf32>
      %cst_27 = arith.constant 9.99999974E-6 : f32
      %52 = vector.broadcast %cst_27 : f32 to vector<1x512xf32>
      %53 = arith.addf %50, %52 : vector<1x512xf32>
      %54 = math.rsqrt %53 : vector<1x512xf32>
      %55 = arith.mulf %51, %54 : vector<1x512xf32>
      %c0_28 = arith.constant 0 : index
      %c0_29 = arith.constant 0 : index
      %56 = vector.load %arg18[%c0_28, %c0_29] : memref<1x512xf32, #tpu.memory_space<vmem>>, vector<1x512xf32>
      tpu.vector_store %arg18[%c0_28, %c0_29], %55 {strides = array<i32>} : memref<1x512xf32, #tpu.memory_space<vmem>>, vector<1x512xf32>,
      %c0_30 = arith.constant 0 : index
      %c0_31 = arith.constant 0 : index
      %57 = vector.load %arg6[%c0_30, %c0_31] : memref<1x512xf32, #tpu.memory_space<vmem>>, vector<1x512xf32>
      %58 = arith.mulf %43, %55 : vector<1x512xf32>
      %59 = arith.subf %57, %58 : vector<1x512xf32>
      %c0_32 = arith.constant 0 : index
      %c0_33 = arith.constant 0 : index
      %60 = vector.load %arg19[%c0_32, %c0_33] : memref<1x512xf32, #tpu.memory_space<vmem>>, vector<1x512xf32>
      tpu.vector_store %arg19[%c0_32, %c0_33], %59 {strides = array<i32>} : memref<1x512xf32, #tpu.memory_space<vmem>>, vector<1x512xf32>,
    } else {
    }
    %c1_i32 = arith.constant 1 : i32
    %30 = arith.cmpi eq, %arg0, %c1_i32 : i32
    %31 = arith.extui %30 : i1 to i32
    %c0_i32_13 = arith.constant 0 : i32
    %32 = arith.cmpi ne, %31, %c0_i32_13 : i32
    scf.if %32 {
      %c0_18 = arith.constant 0 : index
      %c0_19 = arith.constant 0 : index
      %41 = vector.load %arg18[%c0_18, %c0_19] : memref<1x512xf32, #tpu.memory_space<vmem>>, vector<1x512xf32>
      %42 = vector.broadcast %41 : vector<1x512xf32> to vector<16x512xf32>
      %43 = arith.mulf %21, %42 : vector<16x512xf32>
      %c0_20 = arith.constant 0 : index
      %c0_21 = arith.constant 0 : index
      %44 = vector.load %arg19[%c0_20, %c0_21] : memref<1x512xf32, #tpu.memory_space<vmem>>, vector<1x512xf32>
      %45 = vector.broadcast %44 : vector<1x512xf32> to vector<16x512xf32>
      %46 = arith.addf %43, %45 : vector<16x512xf32>
      %47 = arith.truncf %46 : vector<16x512xf32> to vector<16x512xbf16>
      %c0_22 = arith.constant 0 : index
      %c0_23 = arith.constant 0 : index
      %48 = vector.load %arg7[%c0_22, %c0_23] : memref<512x256xbf16, #tpu.memory_space<vmem>>, vector<512x256xbf16>
      %cst_24 = arith.constant dense<0.000000e+00> : vector<16x256xf32>
      %49 = tpu.matmul %47, %48, %cst_24 {dimension_numbers = #tpu.dot_dimension_numbers<[1], [0], [0], [1], [0, 0, 1, 1], [], []>} : vector<16x512xbf16>, vector<512x256xbf16>, vector<16x256xf32> -> vector<16x256xf32>
      %c0_25 = arith.constant 0 : index
      %c0_26 = arith.constant 0 : index
      %50 = vector.load %arg8[%c0_25, %c0_26] : memref<1x256xf32, #tpu.memory_space<vmem>>, vector<1x256xf32>
      %51 = vector.broadcast %50 : vector<1x256xf32> to vector<16x256xf32>
      %52 = arith.addf %49, %51 : vector<16x256xf32>
      %cst_27 = arith.constant 0.000000e+00 : f32
      %53 = vector.broadcast %cst_27 : f32 to vector<16x256xf32>
      %54 = arith.maximumf %52, %53 : vector<16x256xf32>
      %55 = vector.broadcast %12 : vector<16x1xf32> to vector<16x256xf32>
      %56 = arith.mulf %54, %55 : vector<16x256xf32>
      %c0_28 = arith.constant 0 : index
      %c0_29 = arith.constant 0 : index
      %57 = vector.load %arg16[%c0_28, %c0_29] : memref<1x256xf32, #tpu.memory_space<vmem>>, vector<1x256xf32>
      %cst_30 = arith.constant dense<0.000000e+00> : vector<256xf32>
      %58 = vector.multi_reduction <add>, %56, %cst_30 [0] : vector<16x256xf32> to vector<256xf32>
      %59 = vector.shape_cast %58 : vector<256xf32> to vector<1x256xf32>
      %60 = arith.addf %57, %59 : vector<1x256xf32>
      %c0_31 = arith.constant 0 : index
      %c0_32 = arith.constant 0 : index
      %61 = vector.load %arg16[%c0_31, %c0_32] : memref<1x256xf32, #tpu.memory_space<vmem>>, vector<1x256xf32>
      tpu.vector_store %arg16[%c0_31, %c0_32], %60 {strides = array<i32>} : memref<1x256xf32, #tpu.memory_space<vmem>>, vector<1x256xf32>,
      %c0_33 = arith.constant 0 : index
      %c0_34 = arith.constant 0 : index
      %62 = vector.load %arg17[%c0_33, %c0_34] : memref<1x256xf32, #tpu.memory_space<vmem>>, vector<1x256xf32>
      %63 = arith.mulf %56, %54 : vector<16x256xf32>
      %cst_35 = arith.constant dense<0.000000e+00> : vector<256xf32>
      %64 = vector.multi_reduction <add>, %63, %cst_35 [0] : vector<16x256xf32> to vector<256xf32>
      %65 = vector.shape_cast %64 : vector<256xf32> to vector<1x256xf32>
      %66 = arith.addf %62, %65 : vector<1x256xf32>
      %c0_36 = arith.constant 0 : index
      %c0_37 = arith.constant 0 : index
      %67 = vector.load %arg17[%c0_36, %c0_37] : memref<1x256xf32, #tpu.memory_space<vmem>>, vector<1x256xf32>
      tpu.vector_store %arg17[%c0_36, %c0_37], %66 {strides = array<i32>} : memref<1x256xf32, #tpu.memory_space<vmem>>, vector<1x256xf32>,
      %cst_38 = arith.constant 0.000000e+00 : f32
      %68 = vector.broadcast %cst_38 : f32 to vector<16x1xf32>
      %c0_39 = arith.constant 0 : index
      %c0_40 = arith.constant 0 : index
      %69 = vector.load %arg13[%c0_39, %c0_40] : memref<16x1xf32, #tpu.memory_space<vmem>>, vector<16x1xf32>
      tpu.vector_store %arg13[%c0_39, %c0_40], %68 {strides = array<i32>} : memref<16x1xf32, #tpu.memory_space<vmem>>, vector<16x1xf32>,
    } else {
    }
    %c1_i32_14 = arith.constant 1 : i32
    %33 = arith.cmpi eq, %arg0, %c1_i32_14 : i32
    %c0_i32_15 = arith.constant 0 : i32
    %34 = arith.cmpi eq, %arg1, %c0_i32_15 : i32
    %35 = arith.andi %33, %34 : i1
    %36 = arith.extui %35 : i1 to i32
    %c0_i32_16 = arith.constant 0 : i32
    %37 = arith.cmpi ne, %36, %c0_i32_16 : i32
    scf.if %37 {
      %c0_18 = arith.constant 0 : index
      %c0_19 = arith.constant 0 : index
      %41 = vector.load %arg16[%c0_18, %c0_19] : memref<1x256xf32, #tpu.memory_space<vmem>>, vector<1x256xf32>
      %cst_20 = arith.constant 1.250000e-01 : f32
      %42 = vector.broadcast %cst_20 : f32 to vector<1x256xf32>
      %43 = arith.mulf %41, %42 : vector<1x256xf32>
      %c0_21 = arith.constant 0 : index
      %c0_22 = arith.constant 0 : index
      %44 = vector.load %arg17[%c0_21, %c0_22] : memref<1x256xf32, #tpu.memory_space<vmem>>, vector<1x256xf32>
      %cst_23 = arith.constant 1.250000e-01 : f32
      %45 = vector.broadcast %cst_23 : f32 to vector<1x256xf32>
      %46 = arith.mulf %44, %45 : vector<1x256xf32>
      %47 = arith.mulf %43, %43 : vector<1x256xf32>
      %48 = arith.subf %46, %47 : vector<1x256xf32>
      %cst_24 = arith.constant 0.000000e+00 : f32
      %49 = vector.broadcast %cst_24 : f32 to vector<1x256xf32>
      %50 = arith.maximumf %48, %49 : vector<1x256xf32>
      %c0_25 = arith.constant 0 : index
      %c0_26 = arith.constant 0 : index
      %51 = vector.load %arg9[%c0_25, %c0_26] : memref<1x256xf32, #tpu.memory_space<vmem>>, vector<1x256xf32>
      %cst_27 = arith.constant 9.99999974E-6 : f32
      %52 = vector.broadcast %cst_27 : f32 to vector<1x256xf32>
      %53 = arith.addf %50, %52 : vector<1x256xf32>
      %54 = math.rsqrt %53 : vector<1x256xf32>
      %55 = arith.mulf %51, %54 : vector<1x256xf32>
      %c0_28 = arith.constant 0 : index
      %c0_29 = arith.constant 0 : index
      %56 = vector.load %arg20[%c0_28, %c0_29] : memref<1x256xf32, #tpu.memory_space<vmem>>, vector<1x256xf32>
      tpu.vector_store %arg20[%c0_28, %c0_29], %55 {strides = array<i32>} : memref<1x256xf32, #tpu.memory_space<vmem>>, vector<1x256xf32>,
      %c0_30 = arith.constant 0 : index
      %c0_31 = arith.constant 0 : index
      %57 = vector.load %arg10[%c0_30, %c0_31] : memref<1x256xf32, #tpu.memory_space<vmem>>, vector<1x256xf32>
      %58 = arith.mulf %43, %55 : vector<1x256xf32>
      %59 = arith.subf %57, %58 : vector<1x256xf32>
      %c0_32 = arith.constant 0 : index
      %c0_33 = arith.constant 0 : index
      %60 = vector.load %arg21[%c0_32, %c0_33] : memref<1x256xf32, #tpu.memory_space<vmem>>, vector<1x256xf32>
      tpu.vector_store %arg21[%c0_32, %c0_33], %59 {strides = array<i32>} : memref<1x256xf32, #tpu.memory_space<vmem>>, vector<1x256xf32>,
    } else {
    }
    %c2_i32 = arith.constant 2 : i32
    %38 = arith.cmpi eq, %arg0, %c2_i32 : i32
    %39 = arith.extui %38 : i1 to i32
    %c0_i32_17 = arith.constant 0 : i32
    %40 = arith.cmpi ne, %39, %c0_i32_17 : i32
    scf.if %40 {
      %c0_18 = arith.constant 0 : index
      %c0_19 = arith.constant 0 : index
      %41 = vector.load %arg18[%c0_18, %c0_19] : memref<1x512xf32, #tpu.memory_space<vmem>>, vector<1x512xf32>
      %42 = vector.broadcast %41 : vector<1x512xf32> to vector<16x512xf32>
      %43 = arith.mulf %21, %42 : vector<16x512xf32>
      %c0_20 = arith.constant 0 : index
      %c0_21 = arith.constant 0 : index
      %44 = vector.load %arg19[%c0_20, %c0_21] : memref<1x512xf32, #tpu.memory_space<vmem>>, vector<1x512xf32>
      %45 = vector.broadcast %44 : vector<1x512xf32> to vector<16x512xf32>
      %46 = arith.addf %43, %45 : vector<16x512xf32>
      %47 = arith.truncf %46 : vector<16x512xf32> to vector<16x512xbf16>
      %c0_22 = arith.constant 0 : index
      %c0_23 = arith.constant 0 : index
      %48 = vector.load %arg7[%c0_22, %c0_23] : memref<512x256xbf16, #tpu.memory_space<vmem>>, vector<512x256xbf16>
      %cst_24 = arith.constant dense<0.000000e+00> : vector<16x256xf32>
      %49 = tpu.matmul %47, %48, %cst_24 {dimension_numbers = #tpu.dot_dimension_numbers<[1], [0], [0], [1], [0, 0, 1, 1], [], []>} : vector<16x512xbf16>, vector<512x256xbf16>, vector<16x256xf32> -> vector<16x256xf32>
      %c0_25 = arith.constant 0 : index
      %c0_26 = arith.constant 0 : index
      %50 = vector.load %arg8[%c0_25, %c0_26] : memref<1x256xf32, #tpu.memory_space<vmem>>, vector<1x256xf32>
      %51 = vector.broadcast %50 : vector<1x256xf32> to vector<16x256xf32>
      %52 = arith.addf %49, %51 : vector<16x256xf32>
      %cst_27 = arith.constant 0.000000e+00 : f32
      %53 = vector.broadcast %cst_27 : f32 to vector<16x256xf32>
      %54 = arith.maximumf %52, %53 : vector<16x256xf32>
      %c0_28 = arith.constant 0 : index
      %c0_29 = arith.constant 0 : index
      %55 = vector.load %arg20[%c0_28, %c0_29] : memref<1x256xf32, #tpu.memory_space<vmem>>, vector<1x256xf32>
      %56 = vector.broadcast %55 : vector<1x256xf32> to vector<16x256xf32>
      %57 = arith.mulf %54, %56 : vector<16x256xf32>
      %c0_30 = arith.constant 0 : index
      %c0_31 = arith.constant 0 : index
      %58 = vector.load %arg21[%c0_30, %c0_31] : memref<1x256xf32, #tpu.memory_space<vmem>>, vector<1x256xf32>
      %59 = vector.broadcast %58 : vector<1x256xf32> to vector<16x256xf32>
      %60 = arith.addf %57, %59 : vector<16x256xf32>
      %c0_32 = arith.constant 0 : index
      %c0_33 = arith.constant 0 : index
      %61 = vector.load %arg11[%c0_32, %c0_33] : memref<1x256xf32, #tpu.memory_space<vmem>>, vector<1x256xf32>
      %62 = vector.broadcast %61 : vector<1x256xf32> to vector<16x256xf32>
      %63 = arith.mulf %60, %62 : vector<16x256xf32>
      %cst_34 = arith.constant dense<0.000000e+00> : vector<16xf32>
      %64 = vector.multi_reduction <add>, %63, %cst_34 [1] : vector<16x256xf32> to vector<16xf32>
      %65 = vector.shape_cast %64 : vector<16xf32> to vector<16x1xf32>
      %c0_35 = arith.constant 0 : index
      %c0_36 = arith.constant 0 : index
      %66 = vector.load %arg12[%c0_35, %c0_36] : memref<1x1xf32, #tpu.memory_space<vmem>>, vector<1x1xf32>
      %67 = vector.broadcast %66 : vector<1x1xf32> to vector<16x1xf32>
      %68 = arith.addf %65, %67 : vector<16x1xf32>
      %69 = arith.negf %68 : vector<16x1xf32>
      %70 = math.exp %69 : vector<16x1xf32>
      %cst_37 = arith.constant 1.000000e+00 : f32
      %71 = vector.broadcast %cst_37 : f32 to vector<16x1xf32>
      %72 = arith.addf %71, %70 : vector<16x1xf32>
      %73 = arith.divf %71, %72 : vector<16x1xf32>
      %c0_38 = arith.constant 0 : index
      %c0_39 = arith.constant 0 : index
      %74 = vector.load %arg13[%c0_38, %c0_39] : memref<16x1xf32, #tpu.memory_space<vmem>>, vector<16x1xf32>
      tpu.vector_store %arg13[%c0_38, %c0_39], %73 {strides = array<i32>} : memref<16x1xf32, #tpu.memory_space<vmem>>, vector<16x1xf32>,
    } else {
    }
    return
  }
  func.func @transform_0(%arg0: i32, %arg1: i32) -> (i32, i32) {
    %c0_i32 = arith.constant 0 : i32
    %c0_i32_0 = arith.constant 0 : i32
    return %arg1, %c0_i32 : i32, i32
  }
  func.func @transform_1(%arg0: i32, %arg1: i32) -> (i32, i32) {
    %c0_i32 = arith.constant 0 : i32
    %c0_i32_0 = arith.constant 0 : i32
    %c0_i32_1 = arith.constant 0 : i32
    return %c0_i32, %c0_i32_0 : i32, i32
  }
  func.func @transform_2(%arg0: i32, %arg1: i32) -> (i32, i32) {
    %c0_i32 = arith.constant 0 : i32
    %c0_i32_0 = arith.constant 0 : i32
    %c0_i32_1 = arith.constant 0 : i32
    return %c0_i32, %c0_i32_0 : i32, i32
  }
  func.func @transform_3(%arg0: i32, %arg1: i32) -> (i32, i32) {
    %c0_i32 = arith.constant 0 : i32
    %c0_i32_0 = arith.constant 0 : i32
    %c0_i32_1 = arith.constant 0 : i32
    return %c0_i32, %c0_i32_0 : i32, i32
  }
  func.func @transform_4(%arg0: i32, %arg1: i32) -> (i32, i32) {
    %c0_i32 = arith.constant 0 : i32
    %c0_i32_0 = arith.constant 0 : i32
    %c0_i32_1 = arith.constant 0 : i32
    return %c0_i32, %c0_i32_0 : i32, i32
  }
  func.func @transform_5(%arg0: i32, %arg1: i32) -> (i32, i32) {
    %c0_i32 = arith.constant 0 : i32
    %c0_i32_0 = arith.constant 0 : i32
    %c0_i32_1 = arith.constant 0 : i32
    return %c0_i32, %c0_i32_0 : i32, i32
  }
  func.func @transform_6(%arg0: i32, %arg1: i32) -> (i32, i32) {
    %c0_i32 = arith.constant 0 : i32
    %c0_i32_0 = arith.constant 0 : i32
    %c0_i32_1 = arith.constant 0 : i32
    return %c0_i32, %c0_i32_0 : i32, i32
  }
  func.func @transform_7(%arg0: i32, %arg1: i32) -> (i32, i32) {
    %c0_i32 = arith.constant 0 : i32
    %c0_i32_0 = arith.constant 0 : i32
    %c0_i32_1 = arith.constant 0 : i32
    return %c0_i32, %c0_i32_0 : i32, i32
  }
  func.func @transform_8(%arg0: i32, %arg1: i32) -> (i32, i32) {
    %c0_i32 = arith.constant 0 : i32
    %c0_i32_0 = arith.constant 0 : i32
    %c0_i32_1 = arith.constant 0 : i32
    return %c0_i32, %c0_i32_0 : i32, i32
  }
  func.func @transform_9(%arg0: i32, %arg1: i32) -> (i32, i32) {
    %c0_i32 = arith.constant 0 : i32
    %c0_i32_0 = arith.constant 0 : i32
    %c0_i32_1 = arith.constant 0 : i32
    return %c0_i32, %c0_i32_0 : i32, i32
  }
  func.func @transform_10(%arg0: i32, %arg1: i32) -> (i32, i32) {
    %c0_i32 = arith.constant 0 : i32
    %c0_i32_0 = arith.constant 0 : i32
    %c0_i32_1 = arith.constant 0 : i32
    return %c0_i32, %c0_i32_0 : i32, i32
  }
  func.func @transform_11(%arg0: i32, %arg1: i32) -> (i32, i32) {
    %c0_i32 = arith.constant 0 : i32
    %c0_i32_0 = arith.constant 0 : i32
    return %arg1, %c0_i32 : i32, i32
  }
}

</mosaic_0001>

<llo_original>
// kernel: tpu_custom_call.1
$region0: #{tpu_custom_call.1}
  #allocation0 [shape = 'u32[]', space=smem, size = 0x4, offset = 0x4, fixed_abs, tag = 'smem constant byte address 0x4 - core index']
  #allocation1 [shape = 'u32[72,128]{1,0:T(1,128)}', space=vmem, size = 0x9000, scoped, tag = 'internal scratch']
  #allocation2 [shape = 'f32[1,512]{1,0:T(1,128)}', space=vmem, size = 0x800, scoped, tag = 'scratch operand']
  #allocation3 [shape = 'f32[1,512]{1,0:T(1,128)}', space=vmem, size = 0x800, scoped, tag = 'scratch operand']
  #allocation4 [shape = 'f32[1,256]{1,0:T(1,128)}', space=vmem, size = 0x400, scoped, tag = 'scratch operand']
  #allocation5 [shape = 'f32[1,256]{1,0:T(1,128)}', space=vmem, size = 0x400, scoped, tag = 'scratch operand']
  #allocation6 [shape = 'f32[1,512]{1,0:T(1,128)}', space=vmem, size = 0x800, scoped, tag = 'scratch operand']
  #allocation7 [shape = 'f32[1,512]{1,0:T(1,128)}', space=vmem, size = 0x800, scoped, tag = 'scratch operand']
  #allocation8 [shape = 'f32[1,256]{1,0:T(1,128)}', space=vmem, size = 0x400, scoped, tag = 'scratch operand']
  #allocation9 [shape = 'f32[1,256]{1,0:T(1,128)}', space=vmem, size = 0x400, scoped, tag = 'scratch operand']
  #allocation10 [shape = 'f32[1,1]{1,0:T(1,128)S(1)}', space=vmem, size = 0x200, scoped, tag = 'scoped memory for tpu_custom_call.1']
  %s0 = inlined_call_operand.hbm [shape: f32[16,32], index: 0, kind: input, shape index: {}]
  %s1 = inlined_call_operand.hbm [shape: bf16[32,512], index: 1, kind: input, shape index: {}]
  %s2 = inlined_call_operand.hbm [shape: f32[1,512], index: 2, kind: input, shape index: {}]
  %s3 = inlined_call_operand.vmem [shape: f32[1,512], index: 3, kind: input, shape index: {}]
  %s4 = inlined_call_operand.hbm [shape: f32[1,512], index: 4, kind: input, shape index: {}]
  %s5 = inlined_call_operand.hbm [shape: bf16[512,256], index: 5, kind: input, shape index: {}]
  %s6 = inlined_call_operand.vmem [shape: f32[1,256], index: 6, kind: input, shape index: {}]
  %s7 = inlined_call_operand.vmem [shape: f32[1,256], index: 7, kind: input, shape index: {}]
  %s8 = inlined_call_operand.hbm [shape: f32[1,256], index: 8, kind: input, shape index: {}]
  %s9 = inlined_call_operand.vmem [shape: f32[1,256], index: 9, kind: input, shape index: {}]
  %s10 = inlined_call_operand.<no memory space> [shape: f32[1,1], index: 10, kind: input, shape index: {}]
  %s11 = inlined_call_operand.vmem [shape: f32[16,1], index: 11, kind: output, shape index: {}]
  %s12 = sld [smem:[#allocation0]]
  $region125: #{tpu_custom_call.1} parent=0
    _
  %s14 = ssub.s32 1, %s12
  %s15 = scalar_select 0, %s14, %s12
  %v16 = vstv %s10
  %17 = vst [vmem:[#allocation10] sm:$0x1] %v16
  $region1: #{tpu_custom_call.1} parent=0
    #allocation11 [shape = 'u8[8192]{0}', space=vmem, size = 0x2000, scoped, tag = 'input window, operand 0, single buffered']
    #allocation12 [shape = 's32[2]{0}', space=sflag, size = 0x8, scoped, tag = 'scoped memory for tpu_custom_call.1']
    #allocation13 [shape = 'u8[32768]{0}', space=vmem, size = 0x8000, scoped, tag = 'input window, operand 1, single buffered']
    #allocation14 [shape = 's32[1]{0}', space=sflag, size = 0x4, scoped, tag = 'scoped memory for tpu_custom_call.1']
    #allocation15 [shape = 'u8[2048]{0}', space=vmem, size = 0x800, scoped, tag = 'input window, operand 2, single buffered']
    #allocation16 [shape = 'u8[2048]{0}', space=vmem, size = 0x800, scoped, tag = 'input window, operand 4, single buffered']
    #allocation17 [shape = 's32[1]{0}', space=sflag, size = 0x4, scoped, tag = 'scoped memory for tpu_custom_call.1']
    #allocation18 [shape = 'u8[262144]{0}', space=vmem, size = 0x40000, scoped, tag = 'input window, operand 5, single buffered']
    #allocation19 [shape = 'u8[1024]{0}', space=vmem, size = 0x400, scoped, tag = 'input window, operand 8, single buffered']
    #allocation20 [shape = 's32[1]{0}', space=sflag, size = 0x4, scoped, tag = 'scoped memory for tpu_custom_call.1']
    %18 = vsyncpa [#allocation12], 0
    %19 = vsyncpa [#allocation14], 0
    %20 = vsyncpa [#allocation17], 0
    %21 = vsyncpa [#allocation20], 0
    loop: start=0, step=1, limit=5
    $region2: #{tpu_custom_call.1} parent=1 // loop_pre_header
      _
    $region3: #{tpu_custom_call.1} parent=1 // loop_header
      %s23 = sphi 0, %s27
      %p24 = scmp.ge.s32.totalorder %s23, 5
      %s30 = sphi 0, %s42
      %s31 = sphi 0, %s38
      %s32 = sphi 0, %s30
      %s33 = sphi 0, %s31
      %s34 = sphi 0, %s32
      %s35 = sphi 0, %s33
      %s45 = sphi 0, %s47
      %s48 = sphi 0, %s45
      %s49 = sphi 0, %s48
      %s65 = sphi 0, %s49
      %s69 = sphi 0, %s69
      %s71 = sphi 0, %s69
      %s72 = sphi 0, %s71
      %s86 = sphi 0, %s72
      %s90 = sphi 0, %s90
      %s92 = sphi 0, %s90
      %s93 = sphi 0, %s92
      %s107 = sphi 0, %s93
      %s111 = sphi 0, %s111
      %s113 = sphi 0, %s111
      %s114 = sphi 0, %s113
      %s128 = sphi 0, %s114
      %s132 = sphi 0, %s132
      %s134 = sphi 0, %s132
      %s135 = sphi 0, %s134
      %s149 = sphi 0, %s135
      %s153 = sphi 0, %s153
      %s155 = sphi 0, %s153
      %s156 = sphi 0, %s155
      %s170 = sphi 0, %s156
      %s174 = sphi 0, %s174
      %s176 = sphi 0, %s174
      %s177 = sphi 0, %s176
      %s191 = sphi 0, %s177
      %s195 = sphi 0, %s195
      %s197 = sphi 0, %s195
      %s198 = sphi 0, %s197
      %s212 = sphi 0, %s198
      %s216 = sphi 0, %s216
      %s218 = sphi 0, %s216
      %s219 = sphi 0, %s218
      %s233 = sphi 0, %s219
      %s237 = sphi 0, %s237
      %s239 = sphi 0, %s237
      %s240 = sphi 0, %s239
      %s254 = sphi 0, %s240
      %s258 = sphi 0, %s258
      %s260 = sphi 0, %s258
      %s261 = sphi 0, %s260
      %s275 = sphi 0, %s261
      %s281 = sphi 0, %s283
      %s284 = sphi 0, %s281
      %s285 = sphi 0, %s284
      %s301 = sphi 0, %s285
    $region4: #{tpu_custom_call.1} parent=1 // loop_header_branch
      %26 = sbr.rel (%p24) target = $region8
    $region5: #{tpu_custom_call.1} parent=1 // loop_body
      %s28 = ssub.s32 %s23, 1
      %s29 = ssub.s32 %s23, 2
      %s36 = sadd.s32 1, %s31
      %p37 = scmp.ge.s32.totalorder %s36, 1
      %s38 = scalar_select %p37, 0, %s36
      %s39 = sadd.s32 1, %s30
      %s40 = scalar_select %p37, %s39, %s30
      %p41 = scmp.ge.s32.totalorder %s40, 3
      %s42 = scalar_select %p41, 0, %s40
      %s43 = ssub.s32 %s31, %s38
      %p44 = scmp.eq.s32.totalorder %s43, 0
      %s46 = sadd.s32 %s45, 1
      %s47 = scalar_select %p44, %s45, %s46
      %p50 = pneg %p44
      %p51 = scmp.eq.s32.totalorder %s23, 2
      %p52 = por %p50, %p51
      %p53 = scmp.ne.s32.totalorder %s45, %s48
      %p54 = scmp.eq.s32.totalorder %s23, 0
      %p55 = por %p53, %p54
      %p56 = scmp.ne.s32.totalorder %s45, %s48
      %p57 = scmp.eq.s32.totalorder %s28, 2
      %p58 = por %p56, %p57
      %p59 = scmp.ne.s32.totalorder %s48, %s49
      %p60 = scmp.eq.s32.totalorder %s28, 0
      %p61 = por %p59, %p60
      %p62 = scmp.ne.s32.totalorder %s48, %s49
      %p63 = scmp.eq.s32.totalorder %s29, 2
      %p64 = por %p62, %p63
      %p66 = scmp.ne.s32.totalorder %s49, %s65
      %p67 = scmp.eq.s32.totalorder %s29, 0
      %p68 = por %p66, %p67
      %s70 = sadd.s32 %s69, 1
      %p73 = scmp.eq.s32.totalorder %s23, 2
      %p74 = scmp.ne.s32.totalorder %s69, %s71
      %p75 = scmp.eq.s32.totalorder %s23, 0
      %p76 = por %p74, %p75
      %p77 = scmp.ne.s32.totalorder %s69, %s71
      %p78 = scmp.eq.s32.totalorder %s28, 2
      %p79 = por %p77, %p78
      %p80 = scmp.ne.s32.totalorder %s71, %s72
      %p81 = scmp.eq.s32.totalorder %s28, 0
      %p82 = por %p80, %p81
      %p83 = scmp.ne.s32.totalorder %s71, %s72
      %p84 = scmp.eq.s32.totalorder %s29, 2
      %p85 = por %p83, %p84
      %p87 = scmp.ne.s32.totalorder %s72, %s86
      %p88 = scmp.eq.s32.totalorder %s29, 0
      %p89 = por %p87, %p88
      %s91 = sadd.s32 %s90, 1
      %p94 = scmp.eq.s32.totalorder %s23, 2
      %p95 = scmp.ne.s32.totalorder %s90, %s92
      %p96 = scmp.eq.s32.totalorder %s23, 0
      %p97 = por %p95, %p96
      %p98 = scmp.ne.s32.totalorder %s90, %s92
      %p99 = scmp.eq.s32.totalorder %s28, 2
      %p100 = por %p98, %p99
      %p101 = scmp.ne.s32.totalorder %s92, %s93
      %p102 = scmp.eq.s32.totalorder %s28, 0
      %p103 = por %p101, %p102
      %p104 = scmp.ne.s32.totalorder %s92, %s93
      %p105 = scmp.eq.s32.totalorder %s29, 2
      %p106 = por %p104, %p105
      %p108 = scmp.ne.s32.totalorder %s93, %s107
      %p109 = scmp.eq.s32.totalorder %s29, 0
      %p110 = por %p108, %p109
      %s112 = sadd.s32 %s111, 1
      %p115 = scmp.eq.s32.totalorder %s23, 2
      %p116 = scmp.ne.s32.totalorder %s111, %s113
      %p117 = scmp.eq.s32.totalorder %s23, 0
      %p118 = por %p116, %p117
      %p119 = scmp.ne.s32.totalorder %s111, %s113
      %p120 = scmp.eq.s32.totalorder %s28, 2
      %p121 = por %p119, %p120
      %p122 = scmp.ne.s32.totalorder %s113, %s114
      %p123 = scmp.eq.s32.totalorder %s28, 0
      %p124 = por %p122, %p123
      %p125 = scmp.ne.s32.totalorder %s113, %s114
      %p126 = scmp.eq.s32.totalorder %s29, 2
      %p127 = por %p125, %p126
      %p129 = scmp.ne.s32.totalorder %s114, %s128
      %p130 = scmp.eq.s32.totalorder %s29, 0
      %p131 = por %p129, %p130
      %s133 = sadd.s32 %s132, 1
      %p136 = scmp.eq.s32.totalorder %s23, 2
      %p137 = scmp.ne.s32.totalorder %s132, %s134
      %p138 = scmp.eq.s32.totalorder %s23, 0
      %p139 = por %p137, %p138
      %p140 = scmp.ne.s32.totalorder %s132, %s134
      %p141 = scmp.eq.s32.totalorder %s28, 2
      %p142 = por %p140, %p141
      %p143 = scmp.ne.s32.totalorder %s134, %s135
      %p144 = scmp.eq.s32.totalorder %s28, 0
      %p145 = por %p143, %p144
      %p146 = scmp.ne.s32.totalorder %s134, %s135
      %p147 = scmp.eq.s32.totalorder %s29, 2
      %p148 = por %p146, %p147
      %p150 = scmp.ne.s32.totalorder %s135, %s149
      %p151 = scmp.eq.s32.totalorder %s29, 0
      %p152 = por %p150, %p151
      %s154 = sadd.s32 %s153, 1
      %p157 = scmp.eq.s32.totalorder %s23, 2
      %p158 = scmp.ne.s32.totalorder %s153, %s155
      %p159 = scmp.eq.s32.totalorder %s23, 0
      %p160 = por %p158, %p159
      %p161 = scmp.ne.s32.totalorder %s153, %s155
      %p162 = scmp.eq.s32.totalorder %s28, 2
      %p163 = por %p161, %p162
      %p164 = scmp.ne.s32.totalorder %s155, %s156
      %p165 = scmp.eq.s32.totalorder %s28, 0
      %p166 = por %p164, %p165
      %p167 = scmp.ne.s32.totalorder %s155, %s156
      %p168 = scmp.eq.s32.totalorder %s29, 2
      %p169 = por %p167, %p168
      %p171 = scmp.ne.s32.totalorder %s156, %s170
      %p172 = scmp.eq.s32.totalorder %s29, 0
      %p173 = por %p171, %p172
      %s175 = sadd.s32 %s174, 1
      %p178 = scmp.eq.s32.totalorder %s23, 2
      %p179 = scmp.ne.s32.totalorder %s174, %s176
      %p180 = scmp.eq.s32.totalorder %s23, 0
      %p181 = por %p179, %p180
      %p182 = scmp.ne.s32.totalorder %s174, %s176
      %p183 = scmp.eq.s32.totalorder %s28, 2
      %p184 = por %p182, %p183
      %p185 = scmp.ne.s32.totalorder %s176, %s177
      %p186 = scmp.eq.s32.totalorder %s28, 0
      %p187 = por %p185, %p186
      %p188 = scmp.ne.s32.totalorder %s176, %s177
      %p189 = scmp.eq.s32.totalorder %s29, 2
      %p190 = por %p188, %p189
      %p192 = scmp.ne.s32.totalorder %s177, %s191
      %p193 = scmp.eq.s32.totalorder %s29, 0
      %p194 = por %p192, %p193
      %s196 = sadd.s32 %s195, 1
      %p199 = scmp.eq.s32.totalorder %s23, 2
      %p200 = scmp.ne.s32.totalorder %s195, %s197
      %p201 = scmp.eq.s32.totalorder %s23, 0
      %p202 = por %p200, %p201
      %p203 = scmp.ne.s32.totalorder %s195, %s197
      %p204 = scmp.eq.s32.totalorder %s28, 2
      %p205 = por %p203, %p204
      %p206 = scmp.ne.s32.totalorder %s197, %s198
      %p207 = scmp.eq.s32.totalorder %s28, 0
      %p208 = por %p206, %p207
      %p209 = scmp.ne.s32.totalorder %s197, %s198
      %p210 = scmp.eq.s32.totalorder %s29, 2
      %p211 = por %p209, %p210
      %p213 = scmp.ne.s32.totalorder %s198, %s212
      %p214 = scmp.eq.s32.totalorder %s29, 0
      %p215 = por %p213, %p214
      %s217 = sadd.s32 %s216, 1
      %p220 = scmp.eq.s32.totalorder %s23, 2
      %p221 = scmp.ne.s32.totalorder %s216, %s218
      %p222 = scmp.eq.s32.totalorder %s23, 0
      %p223 = por %p221, %p222
      %p224 = scmp.ne.s32.totalorder %s216, %s218
      %p225 = scmp.eq.s32.totalorder %s28, 2
      %p226 = por %p224, %p225
      %p227 = scmp.ne.s32.totalorder %s218, %s219
      %p228 = scmp.eq.s32.totalorder %s28, 0
      %p229 = por %p227, %p228
      %p230 = scmp.ne.s32.totalorder %s218, %s219
      %p231 = scmp.eq.s32.totalorder %s29, 2
      %p232 = por %p230, %p231
      %p234 = scmp.ne.s32.totalorder %s219, %s233
      %p235 = scmp.eq.s32.totalorder %s29, 0
      %p236 = por %p234, %p235
      %s238 = sadd.s32 %s237, 1
      %p241 = scmp.eq.s32.totalorder %s23, 2
      %p242 = scmp.ne.s32.totalorder %s237, %s239
      %p243 = scmp.eq.s32.totalorder %s23, 0
      %p244 = por %p242, %p243
      %p245 = scmp.ne.s32.totalorder %s237, %s239
      %p246 = scmp.eq.s32.totalorder %s28, 2
      %p247 = por %p245, %p246
      %p248 = scmp.ne.s32.totalorder %s239, %s240
      %p249 = scmp.eq.s32.totalorder %s28, 0
      %p250 = por %p248, %p249
      %p251 = scmp.ne.s32.totalorder %s239, %s240
      %p252 = scmp.eq.s32.totalorder %s29, 2
      %p253 = por %p251, %p252
      %p255 = scmp.ne.s32.totalorder %s240, %s254
      %p256 = scmp.eq.s32.totalorder %s29, 0
      %p257 = por %p255, %p256
      %s259 = sadd.s32 %s258, 1
      %p262 = scmp.eq.s32.totalorder %s23, 2
      %p263 = scmp.ne.s32.totalorder %s258, %s260
      %p264 = scmp.eq.s32.totalorder %s23, 0
      %p265 = por %p263, %p264
      %p266 = scmp.ne.s32.totalorder %s258, %s260
      %p267 = scmp.eq.s32.totalorder %s28, 2
      %p268 = por %p266, %p267
      %p269 = scmp.ne.s32.totalorder %s260, %s261
      %p270 = scmp.eq.s32.totalorder %s28, 0
      %p271 = por %p269, %p270
      %p272 = scmp.ne.s32.totalorder %s260, %s261
      %p273 = scmp.eq.s32.totalorder %s29, 2
      %p274 = por %p272, %p273
      %p276 = scmp.ne.s32.totalorder %s261, %s275
      %p277 = scmp.eq.s32.totalorder %s29, 0
      %p278 = por %p276, %p277
      %s279 = ssub.s32 %s31, %s38
      %p280 = scmp.eq.s32.totalorder %s279, 0
      %s282 = sadd.s32 %s281, 1
      %s283 = scalar_select %p280, %s281, %s282
      %p286 = pneg %p280
      %p287 = scmp.eq.s32.totalorder %s23, 2
      %p288 = por %p286, %p287
      %p289 = scmp.ne.s32.totalorder %s281, %s284
      %p290 = scmp.eq.s32.totalorder %s23, 0
      %p291 = por %p289, %p290
      %p292 = scmp.ne.s32.totalorder %s281, %s284
      %p293 = scmp.eq.s32.totalorder %s28, 2
      %p294 = por %p292, %p293
      %p295 = scmp.ne.s32.totalorder %s284, %s285
      %p296 = scmp.eq.s32.totalorder %s28, 0
      %p297 = por %p295, %p296
      %p298 = scmp.ne.s32.totalorder %s284, %s285
      %p299 = scmp.eq.s32.totalorder %s29, 2
      %p300 = por %p298, %p299
      %p302 = scmp.ne.s32.totalorder %s285, %s301
      %p303 = scmp.eq.s32.totalorder %s29, 0
      %p304 = por %p302, %p303
      %p305 = scmp.le.s32.totalorder 1, %s23
      %p306 = scmp.lt.s32.totalorder %s23, 4
      %p307 = pnand %p305, %p306
      %p308 = pneg %p307
      // Predicated region
      $region9: #{tpu_custom_call.1} parent=5 // pred_check
        _
      $region10: #{tpu_custom_call.1} parent=5 // pred_check_branch
        %310 = sbr.rel (%p307) target = $region12
      $region11: #{tpu_custom_call.1} parent=5 // pred_region
        %s311 = ssub.s32 %s23, 1
        // Predicated region
        $region13: #{tpu_custom_call.1} parent=11 // pred_check
          %p312 = pneg %p61
        $region14: #{tpu_custom_call.1} parent=11 // pred_check_branch
          %314 = sbr.rel (%p312) target = $region16
        $region15: #{tpu_custom_call.1} parent=11 // pred_region
          %s315 = smul.u32 2, %s33
          %317 = vsyncadd [#allocation12], 0
          %s318 = smul.addr %s315, 8
          %s319 = scalar_lea.hbm %s0, %s318
          %s320 = sshll.u32 %s319, 4
          %s321 = int_to_ptr.hbm [resolvable:$true] %s320
          %s322 = sshll.u32 [#allocation11], 4
          %s323 = int_to_ptr.vmem [resolvable:$true] %s322
          %328 = dma.hbm_to_vmem [thread:$0]  %s321, 256, %s323, [#allocation12], 128, 128, 8
        $region16: #{tpu_custom_call.1} parent=11 // pred_fallthru
          _
        // Predicated region
        $region17: #{tpu_custom_call.1} parent=11 // pred_check
          %p329 = pneg %p82
        $region18: #{tpu_custom_call.1} parent=11 // pred_check_branch
          %331 = sbr.rel (%p329) target = $region20
        $region19: #{tpu_custom_call.1} parent=11 // pred_region
          %333 = vsyncadd [#allocation14], 0
          %s334 = sshll.u32 %s1, 4
          %s335 = int_to_ptr.hbm [resolvable:$true] %s334
          %s336 = sshll.u32 [#allocation13], 4
          %s337 = int_to_ptr.vmem [resolvable:$true] %s336
          %342 = dma.hbm_to_vmem [thread:$0]  %s335, 1024, %s337, [#allocation14], 256, 256, 16
        $region20: #{tpu_custom_call.1} parent=11 // pred_fallthru
          _
        // Predicated region
        $region21: #{tpu_custom_call.1} parent=11 // pred_check
          %p343 = pneg %p103
        $region22: #{tpu_custom_call.1} parent=11 // pred_check_branch
          %345 = sbr.rel (%p343) target = $region24
        $region23: #{tpu_custom_call.1} parent=11 // pred_region
          %347 = vsyncadd [#allocation14], 0
          %s349 = sshll.u32 %s2, 4
          %s350 = int_to_ptr.hbm [resolvable:$true] %s349
          %s351 = sshll.u32 [#allocation15], 4
          %s352 = int_to_ptr.vmem [resolvable:$true] %s351
          %354 = dma.hbm_to_vmem [thread:$0]  %s350, 64, %s352, [#allocation14]
        $region24: #{tpu_custom_call.1} parent=11 // pred_fallthru
          _
        // Predicated region
        $region25: #{tpu_custom_call.1} parent=11 // pred_check
          %p355 = pneg %p124
        $region26: #{tpu_custom_call.1} parent=11 // pred_check_branch
          %357 = sbr.rel (%p355) target = $region28
        $region27: #{tpu_custom_call.1} parent=11 // pred_region
          _
        $region28: #{tpu_custom_call.1} parent=11 // pred_fallthru
          _
        // Predicated region
        $region29: #{tpu_custom_call.1} parent=11 // pred_check
          %p358 = pneg %p145
        $region30: #{tpu_custom_call.1} parent=11 // pred_check_branch
          %360 = sbr.rel (%p358) target = $region32
        $region31: #{tpu_custom_call.1} parent=11 // pred_region
          %362 = vsyncadd [#allocation17], 0
          %s364 = sshll.u32 %s4, 4
          %s365 = int_to_ptr.hbm [resolvable:$true] %s364
          %s366 = sshll.u32 [#allocation16], 4
          %s367 = int_to_ptr.vmem [resolvable:$true] %s366
          %369 = dma.hbm_to_vmem [thread:$0]  %s365, 64, %s367, [#allocation17]
        $region32: #{tpu_custom_call.1} parent=11 // pred_fallthru
          _
        // Predicated region
        $region33: #{tpu_custom_call.1} parent=11 // pred_check
          %p370 = pneg %p166
        $region34: #{tpu_custom_call.1} parent=11 // pred_check_branch
          %372 = sbr.rel (%p370) target = $region36
        $region35: #{tpu_custom_call.1} parent=11 // pred_region
          %374 = vsyncadd [#allocation17], 0
          %s375 = sshll.u32 %s5, 4
          %s376 = int_to_ptr.hbm [resolvable:$true] %s375
          %s377 = sshll.u32 [#allocation18], 4
          %s378 = int_to_ptr.vmem [resolvable:$true] %s377
          %383 = dma.hbm_to_vmem [thread:$0]  %s376, 8192, %s378, [#allocation17], 128, 128, 8
        $region36: #{tpu_custom_call.1} parent=11 // pred_fallthru
          _
        // Predicated region
        $region37: #{tpu_custom_call.1} parent=11 // pred_check
          %p384 = pneg %p187
        $region38: #{tpu_custom_call.1} parent=11 // pred_check_branch
          %386 = sbr.rel (%p384) target = $region40
        $region39: #{tpu_custom_call.1} parent=11 // pred_region
          _
        $region40: #{tpu_custom_call.1} parent=11 // pred_fallthru
          _
        // Predicated region
        $region41: #{tpu_custom_call.1} parent=11 // pred_check
          %p387 = pneg %p208
        $region42: #{tpu_custom_call.1} parent=11 // pred_check_branch
          %389 = sbr.rel (%p387) target = $region44
        $region43: #{tpu_custom_call.1} parent=11 // pred_region
          _
        $region44: #{tpu_custom_call.1} parent=11 // pred_fallthru
          _
        // Predicated region
        $region45: #{tpu_custom_call.1} parent=11 // pred_check
          %p390 = pneg %p229
        $region46: #{tpu_custom_call.1} parent=11 // pred_check_branch
          %392 = sbr.rel (%p390) target = $region48
        $region47: #{tpu_custom_call.1} parent=11 // pred_region
          %394 = vsyncadd [#allocation20], 0
          %s396 = sshll.u32 %s8, 4
          %s397 = int_to_ptr.hbm [resolvable:$true] %s396
          %s398 = sshll.u32 [#allocation19], 4
          %s399 = int_to_ptr.vmem [resolvable:$true] %s398
          %401 = dma.hbm_to_vmem [thread:$0]  %s397, 32, %s399, [#allocation20]
        $region48: #{tpu_custom_call.1} parent=11 // pred_fallthru
          _
        // Predicated region
        $region49: #{tpu_custom_call.1} parent=11 // pred_check
          %p402 = pneg %p250
        $region50: #{tpu_custom_call.1} parent=11 // pred_check_branch
          %404 = sbr.rel (%p402) target = $region52
        $region51: #{tpu_custom_call.1} parent=11 // pred_region
          _
        $region52: #{tpu_custom_call.1} parent=11 // pred_fallthru
          _
        // Predicated region
        $region53: #{tpu_custom_call.1} parent=11 // pred_check
          %p405 = pneg %p271
        $region54: #{tpu_custom_call.1} parent=11 // pred_check_branch
          %407 = sbr.rel (%p405) target = $region56
        $region55: #{tpu_custom_call.1} parent=11 // pred_region
          _
        $region56: #{tpu_custom_call.1} parent=11 // pred_fallthru
          _
      $region12: #{tpu_custom_call.1} parent=5 // pred_fallthru
        _
      %p408 = scmp.lt.s32.totalorder %s23, 3
      // Predicated region
      $region57: #{tpu_custom_call.1} parent=5 // pred_check
        %p409 = pneg %p408
      $region58: #{tpu_custom_call.1} parent=5 // pred_check_branch
        %411 = sbr.rel (%p409) target = $region60
      $region59: #{tpu_custom_call.1} parent=5 // pred_region
        _
      $region60: #{tpu_custom_call.1} parent=5 // pred_fallthru
        _
      %p412 = scmp.le.s32.totalorder 1, %s23
      %p413 = scmp.lt.s32.totalorder %s23, 4
      %p414 = pnand %p412, %p413
      %p415 = pneg %p414
      // Predicated region
      $region61: #{tpu_custom_call.1} parent=5 // pred_check
        _
      $region62: #{tpu_custom_call.1} parent=5 // pred_check_branch
        %417 = sbr.rel (%p414) target = $region64
      $region63: #{tpu_custom_call.1} parent=5 // pred_region
        %s418 = ssub.s32 %s23, 1
        // Predicated region
        $region65: #{tpu_custom_call.1} parent=63 // pred_check
          %p419 = pneg %p61
        $region66: #{tpu_custom_call.1} parent=63 // pred_check_branch
          %421 = sbr.rel (%p419) target = $region68
        $region67: #{tpu_custom_call.1} parent=63 // pred_region
          %423 = dma.done [#allocation12], 256
        $region68: #{tpu_custom_call.1} parent=63 // pred_fallthru
          _
        // Predicated region
        $region69: #{tpu_custom_call.1} parent=63 // pred_check
          %p424 = pneg %p82
        $region70: #{tpu_custom_call.1} parent=63 // pred_check_branch
          %426 = sbr.rel (%p424) target = $region72
        $region71: #{tpu_custom_call.1} parent=63 // pred_region
          %428 = dma.done [#allocation14], 1024
        $region72: #{tpu_custom_call.1} parent=63 // pred_fallthru
          _
        // Predicated region
        $region73: #{tpu_custom_call.1} parent=63 // pred_check
          %p429 = pneg %p103
        $region74: #{tpu_custom_call.1} parent=63 // pred_check_branch
          %431 = sbr.rel (%p429) target = $region76
        $region75: #{tpu_custom_call.1} parent=63 // pred_region
          %433 = dma.done [#allocation14], 64
        $region76: #{tpu_custom_call.1} parent=63 // pred_fallthru
          _
        // Predicated region
        $region77: #{tpu_custom_call.1} parent=63 // pred_check
          %p434 = pneg %p145
        $region78: #{tpu_custom_call.1} parent=63 // pred_check_branch
          %436 = sbr.rel (%p434) target = $region80
        $region79: #{tpu_custom_call.1} parent=63 // pred_region
          %438 = dma.done [#allocation17], 64
        $region80: #{tpu_custom_call.1} parent=63 // pred_fallthru
          _
        // Predicated region
        $region81: #{tpu_custom_call.1} parent=63 // pred_check
          %p439 = pneg %p166
        $region82: #{tpu_custom_call.1} parent=63 // pred_check_branch
          %441 = sbr.rel (%p439) target = $region84
        $region83: #{tpu_custom_call.1} parent=63 // pred_region
          %443 = dma.done [#allocation17], 8192
        $region84: #{tpu_custom_call.1} parent=63 // pred_fallthru
          _
        // Predicated region
        $region85: #{tpu_custom_call.1} parent=63 // pred_check
          %p444 = pneg %p229
        $region86: #{tpu_custom_call.1} parent=63 // pred_check_branch
          %446 = sbr.rel (%p444) target = $region88
        $region87: #{tpu_custom_call.1} parent=63 // pred_region
          %448 = dma.done [#allocation20], 32
        $region88: #{tpu_custom_call.1} parent=63 // pred_fallthru
          _
        %p449 = pneg %p61
        %p450 = pneg %p58
        %p451 = pneg %p82
        %p452 = pneg %p79
        %p453 = pneg %p103
        %p454 = pneg %p100
        %p455 = pneg %p124
        %p456 = pneg %p121
        %p457 = pneg %p145
        %p458 = pneg %p142
        %p459 = pneg %p166
        %p460 = pneg %p163
        %p461 = pneg %p187
        %p462 = pneg %p184
        %p463 = pneg %p208
        %p464 = pneg %p205
        %p465 = pneg %p229
        %p466 = pneg %p226
        %p467 = pneg %p250
        %p468 = pneg %p247
        %p469 = pneg %p271
        %p470 = pneg %p268
        %p471 = pneg %p297
        %p472 = pneg %p294
        %s473 = smul.u32 2, %s33
        %p474 = scmp.lt.s32.totalorder %s473, 1
        %s475 = scalar_select %p474, %s473, 1
        %s476 = smul.addr %s475, 8
        %s477 = scalar_lea.vmem %s11, %s476
        %s478 = smul.u32 2, %s33
        %s479 = smul.u32 2, %s33
        %p480 = scmp.lt.s32.totalorder %s479, 1
        %s481 = scalar_select %p480, %s479, 1
        %s482 = smul.addr %s481, 8
        %s483 = scalar_lea.vmem %s11, %s482
        %s484 = smul.u32 2, %s33
        %p486 = scmp.eq.s32.totalorder %s32, 0
        %p487 = scmp.eq.s32.totalorder %s33, 0
        %p488 = pnand %p486, %p487
        %p489 = pneg %p488
        // Predicated region
        $region89: #{tpu_custom_call.1} parent=63 // pred_check
          _
        $region90: #{tpu_custom_call.1} parent=63 // pred_check_branch
          %491 = sbr.rel (%p488) target = $region92
        $region91: #{tpu_custom_call.1} parent=63 // pred_region
          %v492 = vlaneseq
          %vm493 = vcmp.ge.s32.totalorder %v492, 0
          %vm494 = vcmp.lt.s32.totalorder %v492, 512
          %vm495 = vmand %vm493, %vm494
          %496 = vst.msk [vmem:[#allocation2] sm:$0xf] %vm495, 0.0
          %497 = vst.msk [vmem:[#allocation3] sm:$0xf] %vm495, 0.0
          %vm498 = vcmp.lt.s32.totalorder %v492, 256
          %vm499 = vmand %vm493, %vm498
          %500 = vst.msk [vmem:[#allocation4] sm:$0x3] %vm499, 0.0
          %501 = vst.msk [vmem:[#allocation5] sm:$0x3] %vm499, 0.0
        $region92: #{tpu_custom_call.1} parent=63 // pred_fallthru
          _
        %s502 = smul.u32 %s33, 16
        %v503 = vlaneseq
        %v504 = vshrl.u32 %v503, 7
        %v505 = vadd.s32 %v504, 8
        %v506 = vstv %s502
        %v507 = vadd.s32 %v506, %v504
        %v508 = vadd.s32 %v506, %v505
        %vm509 = vcmp.lt.s32.totalorder %v507, 8
        %vm510 = vcmp.lt.s32.totalorder %v508, 8
        %v511 = vsel %vm509, 1, 0
        %v512 = vsel %vm510, 1, 0
        %v513 = vcvt.s32.f32 %v511
        %v514 = vcvt.s32.f32 %v512
        %v515 = vld [vmem:[#allocation11] sm:$0xff]
        %v516 = vld [vmem:[#allocation11 + $0x8] sm:$0xff]
        %v517 = vpack.c.bf16 %v516, %v515
        %v518 = vld [vmem:[#allocation13] sm:$0xff]
        %v519 = vld [vmem:[#allocation13 + $0x8] sm:$0xff]
        %v520 = vld [vmem:[#allocation13 + $0x10] sm:$0xff]
        %v521 = vld [vmem:[#allocation13 + $0x18] sm:$0xff]
        %v522 = vld [vmem:[#allocation13 + $0x20] sm:$0xff]
        %v523 = vld [vmem:[#allocation13 + $0x28] sm:$0xff]
        %v524 = vld [vmem:[#allocation13 + $0x30] sm:$0xff]
        %v525 = vld [vmem:[#allocation13 + $0x38] sm:$0xff]
        %v526 = vld [vmem:[#allocation15] sm:$0xf]
        %v528 = vperm.slane %v526, 0
        %v529 = vperm.slane %v526, 1
        %v530 = vperm.slane %v526, 2
        %v531 = vperm.slane %v526, 3
        %v544 = vunpack.c.l.b16 %v518
        %v545 = vunpack.c.h.b16 %v518
        %v546 = vunpack.c.l.b16 %v519
        %v547 = vunpack.c.h.b16 %v519
        %v548 = vunpack.c.l.b16 %v520
        %v549 = vunpack.c.h.b16 %v520
        %v550 = vunpack.c.l.b16 %v521
        %v551 = vunpack.c.h.b16 %v521
        %v552 = vunpack.c.l.b16 %v522
        %v553 = vunpack.c.h.b16 %v522
        %v554 = vunpack.c.l.b16 %v523
        %v555 = vunpack.c.h.b16 %v523
        %v556 = vunpack.c.l.b16 %v524
        %v557 = vunpack.c.h.b16 %v524
        %v558 = vunpack.c.l.b16 %v525
        %v559 = vunpack.c.h.b16 %v525
        %v560 = vpack.c.b16 %v548, %v544
        %v561 = vpack.c.b16 %v549, %v545
        %v562 = vpack.c.b16 %v550, %v546
        %v563 = vpack.c.b16 %v551, %v547
        %v564 = vpack.c.b16 %v556, %v552
        %v565 = vpack.c.b16 %v557, %v553
        %v566 = vpack.c.b16 %v558, %v554
        %v567 = vpack.c.b16 %v559, %v555
        %vm576 = vcmask 261120
        %v578 = vsel %vm576, %v517, 0
        %580 = vmatpush.bf16.msra.mxu0 0
        %581 = vmatpush.bf16.msra.mxu0 0
        %582 = vmatpush.bf16.msra.mxu0 0
        %583 = vmatpush.bf16.msra.mxu0 0
        %584 = vmatpush.bf16.msra.mxu0 0
        %585 = vmatpush.bf16.msra.mxu0 0
        %586 = vmatpush.bf16.msra.mxu0 %v564
        %587 = vmatpush.bf16.msra.mxu0 %v560
        %588 = vmatmul.bf16.gmra.mxu0 %v578
        %v589 = vpop.f32.mrf.mxu0
        %v590 = vadd.f32 %v528, %v589
        %v591 = vpop.f32.mrf.mxu0
        %v592 = vadd.f32 %v528, %v591
        %593 = vdwg.mxu0
        %594 = vmatpush.bf16.msra.mxu0 0
        %595 = vmatpush.bf16.msra.mxu0 0
        %596 = vmatpush.bf16.msra.mxu0 0
        %597 = vmatpush.bf16.msra.mxu0 0
        %598 = vmatpush.bf16.msra.mxu0 0
        %599 = vmatpush.bf16.msra.mxu0 0
        %600 = vmatpush.bf16.msra.mxu0 %v565
        %601 = vmatpush.bf16.msra.mxu0 %v561
        %602 = vmatmul.bf16.gmra.mxu0 %v578
        %v603 = vpop.f32.mrf.mxu0
        %v604 = vadd.f32 %v529, %v603
        %v605 = vpop.f32.mrf.mxu0
        %v606 = vadd.f32 %v529, %v605
        %607 = vdwg.mxu0
        %608 = vmatpush.bf16.msra.mxu0 0
        %609 = vmatpush.bf16.msra.mxu0 0
        %610 = vmatpush.bf16.msra.mxu0 0
        %611 = vmatpush.bf16.msra.mxu0 0
        %612 = vmatpush.bf16.msra.mxu0 0
        %613 = vmatpush.bf16.msra.mxu0 0
        %614 = vmatpush.bf16.msra.mxu0 %v566
        %615 = vmatpush.bf16.msra.mxu0 %v562
        %616 = vmatmul.bf16.gmra.mxu0 %v578
        %v617 = vpop.f32.mrf.mxu0
        %v618 = vadd.f32 %v530, %v617
        %v619 = vpop.f32.mrf.mxu0
        %v620 = vadd.f32 %v530, %v619
        %621 = vdwg.mxu0
        %622 = vmatpush.bf16.msra.mxu0 0
        %623 = vmatpush.bf16.msra.mxu0 0
        %624 = vmatpush.bf16.msra.mxu0 0
        %625 = vmatpush.bf16.msra.mxu0 0
        %626 = vmatpush.bf16.msra.mxu0 0
        %627 = vmatpush.bf16.msra.mxu0 0
        %628 = vmatpush.bf16.msra.mxu0 %v567
        %629 = vmatpush.bf16.msra.mxu0 %v563
        %630 = vmatmul.bf16.gmra.mxu0 %v578
        %v631 = vpop.f32.mrf.mxu0
        %v632 = vadd.f32 %v531, %v631
        %v633 = vpop.f32.mrf.mxu0
        %v634 = vadd.f32 %v531, %v633
        %635 = vdwg.mxu0
        %v636 = vmax.f32 %v590, 0.0
        %v637 = vmax.f32 %v604, 0.0
        %v638 = vmax.f32 %v618, 0.0
        %v639 = vmax.f32 %v632, 0.0
        %v640 = vmax.f32 %v592, 0.0
        %v641 = vmax.f32 %v606, 0.0
        %v642 = vmax.f32 %v620, 0.0
        %v643 = vmax.f32 %v634, 0.0
        // Predicated region
        $region93: #{tpu_custom_call.1} parent=63 // pred_check
          %p644 = pneg %p486
        $region94: #{tpu_custom_call.1} parent=63 // pred_check_branch
          %646 = sbr.rel (%p644) target = $region96
        $region95: #{tpu_custom_call.1} parent=63 // pred_region
          %v647 = vmul.f32 %v636, %v513
          %v648 = vmul.f32 %v637, %v513
          %v649 = vmul.f32 %v638, %v513
          %v650 = vmul.f32 %v639, %v513
          %v651 = vmul.f32 %v640, %v514
          %v652 = vmul.f32 %v641, %v514
          %v653 = vmul.f32 %v642, %v514
          %v654 = vmul.f32 %v643, %v514
          %v655 = vld [vmem:[#allocation2] sm:$0xf]
          %v656 = vadd.f32 %v647, %v651
          %v657 = vrot.slane %v656, 4
          %v658 = vadd.f32 %v656, %v657
          %v659 = vrot.slane %v658, 2
          %v660 = vadd.f32 %v658, %v659
          %v661 = vrot.slane %v660, 1
          %v662 = vadd.f32 %v660, %v661
          %v663 = vadd.f32 %v648, %v652
          %v664 = vrot.slane %v663, 4
          %v665 = vadd.f32 %v663, %v664
          %v666 = vrot.slane %v665, 2
          %v667 = vadd.f32 %v665, %v666
          %v668 = vrot.slane %v667, 1
          %v669 = vadd.f32 %v667, %v668
          %v670 = vadd.f32 %v649, %v653
          %v671 = vrot.slane %v670, 4
          %v672 = vadd.f32 %v670, %v671
          %v673 = vrot.slane %v672, 2
          %v674 = vadd.f32 %v672, %v673
          %v675 = vrot.slane %v674, 1
          %v676 = vadd.f32 %v674, %v675
          %v677 = vadd.f32 %v650, %v654
          %v678 = vrot.slane %v677, 4
          %v679 = vadd.f32 %v677, %v678
          %v680 = vrot.slane %v679, 2
          %v681 = vadd.f32 %v679, %v680
          %v682 = vrot.slane %v681, 1
          %v683 = vadd.f32 %v681, %v682
          %v688 = vrot.slane %v669, 7
          %v689 = vrot.slane %v676, 6
          %v690 = vrot.slane %v683, 5
          %vm691 = vcmask 1040384
          %v692 = vsel %vm691, %v662, %v688
          %vm693 = vcmask 1042434
          %v694 = vsel %vm693, %v689, %v690
          %vm695 = vcmask 1041408
          %v696 = vsel %vm695, %v692, %v694
          %v698 = vadd.f32 %v655, %v696
          %v699 = vlaneseq
          %vm700 = vcmp.ge.s32.totalorder %v699, 0
          %vm701 = vcmp.lt.s32.totalorder %v699, 512
          %vm702 = vmand %vm700, %vm701
          %703 = vst.msk [vmem:[#allocation2] sm:$0xf] %vm702, %v698
          %v704 = vld [vmem:[#allocation3] sm:$0xf]
          %v705 = vmul.f32 %v647, %v636
          %v706 = vmul.f32 %v648, %v637
          %v707 = vmul.f32 %v649, %v638
          %v708 = vmul.f32 %v650, %v639
          %v709 = vmul.f32 %v651, %v640
          %v710 = vmul.f32 %v652, %v641
          %v711 = vmul.f32 %v653, %v642
          %v712 = vmul.f32 %v654, %v643
          %v713 = vadd.f32 %v705, %v709
          %v714 = vrot.slane %v713, 4
          %v715 = vadd.f32 %v713, %v714
          %v716 = vrot.slane %v715, 2
          %v717 = vadd.f32 %v715, %v716
          %v718 = vrot.slane %v717, 1
          %v719 = vadd.f32 %v717, %v718
          %v720 = vadd.f32 %v706, %v710
          %v721 = vrot.slane %v720, 4
          %v722 = vadd.f32 %v720, %v721
          %v723 = vrot.slane %v722, 2
          %v724 = vadd.f32 %v722, %v723
          %v725 = vrot.slane %v724, 1
          %v726 = vadd.f32 %v724, %v725
          %v727 = vadd.f32 %v707, %v711
          %v728 = vrot.slane %v727, 4
          %v729 = vadd.f32 %v727, %v728
          %v730 = vrot.slane %v729, 2
          %v731 = vadd.f32 %v729, %v730
          %v732 = vrot.slane %v731, 1
          %v733 = vadd.f32 %v731, %v732
          %v734 = vadd.f32 %v708, %v712
          %v735 = vrot.slane %v734, 4
          %v736 = vadd.f32 %v734, %v735
          %v737 = vrot.slane %v736, 2
          %v738 = vadd.f32 %v736, %v737
          %v739 = vrot.slane %v738, 1
          %v740 = vadd.f32 %v738, %v739
          %v745 = vrot.slane %v726, 7
          %v746 = vrot.slane %v733, 6
          %v747 = vrot.slane %v740, 5
          %v748 = vsel %vm691, %v719, %v745
          %v749 = vsel %vm693, %v746, %v747
          %v750 = vsel %vm695, %v748, %v749
          %v752 = vadd.f32 %v704, %v750
          %753 = vst.msk [vmem:[#allocation3] sm:$0xf] %vm702, %v752
          %vm754 = vcmask 7168
          %755 = vst.msk [vmem:[%s483] sm:$0xff] %vm754, 0.0
          %756 = vst.msk [vmem:[%s483 + $0x8] sm:$0xff] %vm754, 0.0
        $region96: #{tpu_custom_call.1} parent=63 // pred_fallthru
          _
        // Predicated region
        $region97: #{tpu_custom_call.1} parent=63 // pred_check
          _
        $region98: #{tpu_custom_call.1} parent=63 // pred_check_branch
          %758 = sbr.rel (%p488) target = $region100
        $region99: #{tpu_custom_call.1} parent=63 // pred_region
          %v759 = vld [vmem:[#allocation2] sm:$0xf]
          %v760 = vmul.f32 %v759, 0.125
          %v761 = vld [vmem:[#allocation3] sm:$0xf]
          %v762 = vmul.f32 %v761, 0.125
          %v763 = vmul.f32 %v760, %v760
          %v764 = vsub.f32 %v762, %v763
          %v765 = vmax.f32 %v764, 0.0
          %v766 = vld [vmem:[%s3] sm:$0xf]
          %v767 = vadd.f32 %v765, 1e-05
          %v768 = vrsqrt.pop %v767
          %v769 = vmul.f32 %v768, %v767
          %v770 = vmul.f32 %v769, %v768
          %v771 = vmul.f32 0.5, %v770
          %v772 = vsub.f32 1.5, %v771
          %v773 = vmul.f32 %v768, %v772
          %vm774 = vweird.f32 %v767
          %vm775 = vweird.f32 %v768
          %vm776 = vmor %vm774, %vm775
          %v777 = vsel %vm776, %v768, %v773
          %v778 = vmul.f32 %v766, %v777
          %v779 = vlaneseq
          %vm780 = vcmp.ge.s32.totalorder %v779, 0
          %vm781 = vcmp.lt.s32.totalorder %v779, 512
          %vm782 = vmand %vm780, %vm781
          %783 = vst.msk [vmem:[#allocation6] sm:$0xf] %vm782, %v778
          %v784 = vld [vmem:[#allocation16] sm:$0xf]
          %v785 = vmul.f32 %v760, %v778
          %v786 = vsub.f32 %v784, %v785
          %787 = vst.msk [vmem:[#allocation7] sm:$0xf] %vm782, %v786
        $region100: #{tpu_custom_call.1} parent=63 // pred_fallthru
          _
        %p788 = scmp.eq.s32.totalorder %s32, 1
        // Predicated region
        $region101: #{tpu_custom_call.1} parent=63 // pred_check
          %p789 = pneg %p788
        $region102: #{tpu_custom_call.1} parent=63 // pred_check_branch
          %791 = sbr.rel (%p789) target = $region104
        $region103: #{tpu_custom_call.1} parent=63 // pred_region
          %v792 = vld [vmem:[#allocation6] sm:$0xf]
          %v794 = vperm.slane %v792, 0
          %v795 = vperm.slane %v792, 1
          %v796 = vperm.slane %v792, 2
          %v797 = vperm.slane %v792, 3
          %v802 = vmul.f32 %v636, %v794
          %v803 = vmul.f32 %v637, %v795
          %v804 = vmul.f32 %v638, %v796
          %v805 = vmul.f32 %v639, %v797
          %v806 = vmul.f32 %v640, %v794
          %v807 = vmul.f32 %v641, %v795
          %v808 = vmul.f32 %v642, %v796
          %v809 = vmul.f32 %v643, %v797
          %v810 = vld [vmem:[#allocation7] sm:$0xf]
          %v812 = vperm.slane %v810, 0
          %v813 = vperm.slane %v810, 1
          %v814 = vperm.slane %v810, 2
          %v815 = vperm.slane %v810, 3
          %v820 = vadd.f32 %v802, %v812
          %v821 = vadd.f32 %v803, %v813
          %v822 = vadd.f32 %v804, %v814
          %v823 = vadd.f32 %v805, %v815
          %v824 = vadd.f32 %v806, %v812
          %v825 = vadd.f32 %v807, %v813
          %v826 = vadd.f32 %v808, %v814
          %v827 = vadd.f32 %v809, %v815
          %v828 = vpack.c.bf16 %v824, %v820
          %v829 = vpack.c.bf16 %v825, %v821
          %v830 = vpack.c.bf16 %v826, %v822
          %v831 = vpack.c.bf16 %v827, %v823
          %v832 = vld [vmem:[#allocation18] sm:$0xff]
          %v833 = vld [vmem:[#allocation18 + $0x8] sm:$0xff]
          %v834 = vld [vmem:[#allocation18 + $0x10] sm:$0xff]
          %v835 = vld [vmem:[#allocation18 + $0x18] sm:$0xff]
          %v836 = vld [vmem:[#allocation18 + $0x20] sm:$0xff]
          %v837 = vld [vmem:[#allocation18 + $0x28] sm:$0xff]
          %v838 = vld [vmem:[#allocation18 + $0x30] sm:$0xff]
          %v839 = vld [vmem:[#allocation18 + $0x38] sm:$0xff]
          %v840 = vld [vmem:[#allocation18 + $0x40] sm:$0xff]
          %v841 = vld [vmem:[#allocation18 + $0x48] sm:$0xff]
          %v842 = vld [vmem:[#allocation18 + $0x50] sm:$0xff]
          %v843 = vld [vmem:[#allocation18 + $0x58] sm:$0xff]
          %v844 = vld [vmem:[#allocation18 + $0x60] sm:$0xff]
          %v845 = vld [vmem:[#allocation18 + $0x68] sm:$0xff]
          %v846 = vld [vmem:[#allocation18 + $0x70] sm:$0xff]
          %v847 = vld [vmem:[#allocation18 + $0x78] sm:$0xff]
          %v848 = vld [vmem:[#allocation18 + $0x80] sm:$0xff]
          %v849 = vld [vmem:[#allocation18 + $0x88] sm:$0xff]
          %v850 = vld [vmem:[#allocation18 + $0x90] sm:$0xff]
          %v851 = vld [vmem:[#allocation18 + $0x98] sm:$0xff]
          %v852 = vld [vmem:[#allocation18 + $0xa0] sm:$0xff]
          %v853 = vld [vmem:[#allocation18 + $0xa8] sm:$0xff]
          %v854 = vld [vmem:[#allocation18 + $0xb0] sm:$0xff]
          %v855 = vld [vmem:[#allocation18 + $0xb8] sm:$0xff]
          %v856 = vld [vmem:[#allocation18 + $0xc0] sm:$0xff]
          %v857 = vld [vmem:[#allocation18 + $0xc8] sm:$0xff]
          %v858 = vld [vmem:[#allocation18 + $0xd0] sm:$0xff]
          %v859 = vld [vmem:[#allocation18 + $0xd8] sm:$0xff]
          %v860 = vld [vmem:[#allocation18 + $0xe0] sm:$0xff]
          %v861 = vld [vmem:[#allocation18 + $0xe8] sm:$0xff]
          %v862 = vld [vmem:[#allocation18 + $0xf0] sm:$0xff]
          %v863 = vld [vmem:[#allocation18 + $0xf8] sm:$0xff]
          %v864 = vld [vmem:[#allocation18 + $0x100] sm:$0xff]
          %v865 = vld [vmem:[#allocation18 + $0x108] sm:$0xff]
          %v866 = vld [vmem:[#allocation18 + $0x110] sm:$0xff]
          %v867 = vld [vmem:[#allocation18 + $0x118] sm:$0xff]
          %v868 = vld [vmem:[#allocation18 + $0x120] sm:$0xff]
          %v869 = vld [vmem:[#allocation18 + $0x128] sm:$0xff]
          %v870 = vld [vmem:[#allocation18 + $0x130] sm:$0xff]
          %v871 = vld [vmem:[#allocation18 + $0x138] sm:$0xff]
          %v872 = vld [vmem:[#allocation18 + $0x140] sm:$0xff]
          %v873 = vld [vmem:[#allocation18 + $0x148] sm:$0xff]
          %v874 = vld [vmem:[#allocation18 + $0x150] sm:$0xff]
          %v875 = vld [vmem:[#allocation18 + $0x158] sm:$0xff]
          %v876 = vld [vmem:[#allocation18 + $0x160] sm:$0xff]
          %v877 = vld [vmem:[#allocation18 + $0x168] sm:$0xff]
          %v878 = vld [vmem:[#allocation18 + $0x170] sm:$0xff]
          %v879 = vld [vmem:[#allocation18 + $0x178] sm:$0xff]
          %v880 = vld [vmem:[#allocation18 + $0x180] sm:$0xff]
          %v881 = vld [vmem:[#allocation18 + $0x188] sm:$0xff]
          %v882 = vld [vmem:[#allocation18 + $0x190] sm:$0xff]
          %v883 = vld [vmem:[#allocation18 + $0x198] sm:$0xff]
          %v884 = vld [vmem:[#allocation18 + $0x1a0] sm:$0xff]
          %v885 = vld [vmem:[#allocation18 + $0x1a8] sm:$0xff]
          %v886 = vld [vmem:[#allocation18 + $0x1b0] sm:$0xff]
          %v887 = vld [vmem:[#allocation18 + $0x1b8] sm:$0xff]
          %v888 = vld [vmem:[#allocation18 + $0x1c0] sm:$0xff]
          %v889 = vld [vmem:[#allocation18 + $0x1c8] sm:$0xff]
          %v890 = vld [vmem:[#allocation18 + $0x1d0] sm:$0xff]
          %v891 = vld [vmem:[#allocation18 + $0x1d8] sm:$0xff]
          %v892 = vld [vmem:[#allocation18 + $0x1e0] sm:$0xff]
          %v893 = vld [vmem:[#allocation18 + $0x1e8] sm:$0xff]
          %v894 = vld [vmem:[#allocation18 + $0x1f0] sm:$0xff]
          %v895 = vld [vmem:[#allocation18 + $0x1f8] sm:$0xff]
          %v896 = vld [vmem:[%s6] sm:$0x3]
          %v898 = vperm.slane %v896, 0
          %v899 = vperm.slane %v896, 1
          %v966 = vunpack.c.l.b16 %v832
          %v967 = vunpack.c.h.b16 %v832
          %v968 = vunpack.c.l.b16 %v833
          %v969 = vunpack.c.h.b16 %v833
          %v970 = vunpack.c.l.b16 %v834
          %v971 = vunpack.c.h.b16 %v834
          %v972 = vunpack.c.l.b16 %v835
          %v973 = vunpack.c.h.b16 %v835
          %v974 = vunpack.c.l.b16 %v836
          %v975 = vunpack.c.h.b16 %v836
          %v976 = vunpack.c.l.b16 %v837
          %v977 = vunpack.c.h.b16 %v837
          %v978 = vunpack.c.l.b16 %v838
          %v979 = vunpack.c.h.b16 %v838
          %v980 = vunpack.c.l.b16 %v839
          %v981 = vunpack.c.h.b16 %v839
          %v982 = vunpack.c.l.b16 %v840
          %v983 = vunpack.c.h.b16 %v840
          %v984 = vunpack.c.l.b16 %v841
          %v985 = vunpack.c.h.b16 %v841
          %v986 = vunpack.c.l.b16 %v842
          %v987 = vunpack.c.h.b16 %v842
          %v988 = vunpack.c.l.b16 %v843
          %v989 = vunpack.c.h.b16 %v843
          %v990 = vunpack.c.l.b16 %v844
          %v991 = vunpack.c.h.b16 %v844
          %v992 = vunpack.c.l.b16 %v845
          %v993 = vunpack.c.h.b16 %v845
          %v994 = vunpack.c.l.b16 %v846
          %v995 = vunpack.c.h.b16 %v846
          %v996 = vunpack.c.l.b16 %v847
          %v997 = vunpack.c.h.b16 %v847
          %v998 = vunpack.c.l.b16 %v848
          %v999 = vunpack.c.h.b16 %v848
          %v1000 = vunpack.c.l.b16 %v849
          %v1001 = vunpack.c.h.b16 %v849
          %v1002 = vunpack.c.l.b16 %v850
          %v1003 = vunpack.c.h.b16 %v850
          %v1004 = vunpack.c.l.b16 %v851
          %v1005 = vunpack.c.h.b16 %v851
          %v1006 = vunpack.c.l.b16 %v852
          %v1007 = vunpack.c.h.b16 %v852
          %v1008 = vunpack.c.l.b16 %v853
          %v1009 = vunpack.c.h.b16 %v853
          %v1010 = vunpack.c.l.b16 %v854
          %v1011 = vunpack.c.h.b16 %v854
          %v1012 = vunpack.c.l.b16 %v855
          %v1013 = vunpack.c.h.b16 %v855
          %v1014 = vunpack.c.l.b16 %v856
          %v1015 = vunpack.c.h.b16 %v856
          %v1016 = vunpack.c.l.b16 %v857
          %v1017 = vunpack.c.h.b16 %v857
          %v1018 = vunpack.c.l.b16 %v858
          %v1019 = vunpack.c.h.b16 %v858
          %v1020 = vunpack.c.l.b16 %v859
          %v1021 = vunpack.c.h.b16 %v859
          %v1022 = vunpack.c.l.b16 %v860
          %v1023 = vunpack.c.h.b16 %v860
          %v1024 = vunpack.c.l.b16 %v861
          %v1025 = vunpack.c.h.b16 %v861
          %v1026 = vunpack.c.l.b16 %v862
          %v1027 = vunpack.c.h.b16 %v862
          %v1028 = vunpack.c.l.b16 %v863
          %v1029 = vunpack.c.h.b16 %v863
          %v1030 = vunpack.c.l.b16 %v864
          %v1031 = vunpack.c.h.b16 %v864
          %v1032 = vunpack.c.l.b16 %v865
          %v1033 = vunpack.c.h.b16 %v865
          %v1034 = vunpack.c.l.b16 %v866
          %v1035 = vunpack.c.h.b16 %v866
          %v1036 = vunpack.c.l.b16 %v867
          %v1037 = vunpack.c.h.b16 %v867
          %v1038 = vunpack.c.l.b16 %v868
          %v1039 = vunpack.c.h.b16 %v868
          %v1040 = vunpack.c.l.b16 %v869
          %v1041 = vunpack.c.h.b16 %v869
          %v1042 = vunpack.c.l.b16 %v870
          %v1043 = vunpack.c.h.b16 %v870
          %v1044 = vunpack.c.l.b16 %v871
          %v1045 = vunpack.c.h.b16 %v871
          %v1046 = vunpack.c.l.b16 %v872
          %v1047 = vunpack.c.h.b16 %v872
          %v1048 = vunpack.c.l.b16 %v873
          %v1049 = vunpack.c.h.b16 %v873
          %v1050 = vunpack.c.l.b16 %v874
          %v1051 = vunpack.c.h.b16 %v874
          %v1052 = vunpack.c.l.b16 %v875
          %v1053 = vunpack.c.h.b16 %v875
          %v1054 = vunpack.c.l.b16 %v876
          %v1055 = vunpack.c.h.b16 %v876
          %v1056 = vunpack.c.l.b16 %v877
          %v1057 = vunpack.c.h.b16 %v877
          %v1058 = vunpack.c.l.b16 %v878
          %v1059 = vunpack.c.h.b16 %v878
          %v1060 = vunpack.c.l.b16 %v879
          %v1061 = vunpack.c.h.b16 %v879
          %v1062 = vunpack.c.l.b16 %v880
          %v1063 = vunpack.c.h.b16 %v880
          %v1064 = vunpack.c.l.b16 %v881
          %v1065 = vunpack.c.h.b16 %v881
          %v1066 = vunpack.c.l.b16 %v882
          %v1067 = vunpack.c.h.b16 %v882
          %v1068 = vunpack.c.l.b16 %v883
          %v1069 = vunpack.c.h.b16 %v883
          %v1070 = vunpack.c.l.b16 %v884
          %v1071 = vunpack.c.h.b16 %v884
          %v1072 = vunpack.c.l.b16 %v885
          %v1073 = vunpack.c.h.b16 %v885
          %v1074 = vunpack.c.l.b16 %v886
          %v1075 = vunpack.c.h.b16 %v886
          %v1076 = vunpack.c.l.b16 %v887
          %v1077 = vunpack.c.h.b16 %v887
          %v1078 = vunpack.c.l.b16 %v888
          %v1079 = vunpack.c.h.b16 %v888
          %v1080 = vunpack.c.l.b16 %v889
          %v1081 = vunpack.c.h.b16 %v889
          %v1082 = vunpack.c.l.b16 %v890
          %v1083 = vunpack.c.h.b16 %v890
          %v1084 = vunpack.c.l.b16 %v891
          %v1085 = vunpack.c.h.b16 %v891
          %v1086 = vunpack.c.l.b16 %v892
          %v1087 = vunpack.c.h.b16 %v892
          %v1088 = vunpack.c.l.b16 %v893
          %v1089 = vunpack.c.h.b16 %v893
          %v1090 = vunpack.c.l.b16 %v894
          %v1091 = vunpack.c.h.b16 %v894
          %v1092 = vunpack.c.l.b16 %v895
          %v1093 = vunpack.c.h.b16 %v895
          %v1094 = vpack.c.b16 %v968, %v966
          %v1095 = vpack.c.b16 %v969, %v967
          %v1096 = vpack.c.b16 %v972, %v970
          %v1097 = vpack.c.b16 %v973, %v971
          %v1098 = vpack.c.b16 %v976, %v974
          %v1099 = vpack.c.b16 %v977, %v975
          %v1100 = vpack.c.b16 %v980, %v978
          %v1101 = vpack.c.b16 %v981, %v979
          %v1102 = vpack.c.b16 %v984, %v982
          %v1103 = vpack.c.b16 %v985, %v983
          %v1104 = vpack.c.b16 %v988, %v986
          %v1105 = vpack.c.b16 %v989, %v987
          %v1106 = vpack.c.b16 %v992, %v990
          %v1107 = vpack.c.b16 %v993, %v991
          %v1108 = vpack.c.b16 %v996, %v994
          %v1109 = vpack.c.b16 %v997, %v995
          %v1110 = vpack.c.b16 %v1000, %v998
          %v1111 = vpack.c.b16 %v1001, %v999
          %v1112 = vpack.c.b16 %v1004, %v1002
          %v1113 = vpack.c.b16 %v1005, %v1003
          %v1114 = vpack.c.b16 %v1008, %v1006
          %v1115 = vpack.c.b16 %v1009, %v1007
          %v1116 = vpack.c.b16 %v1012, %v1010
          %v1117 = vpack.c.b16 %v1013, %v1011
          %v1118 = vpack.c.b16 %v1016, %v1014
          %v1119 = vpack.c.b16 %v1017, %v1015
          %v1120 = vpack.c.b16 %v1020, %v1018
          %v1121 = vpack.c.b16 %v1021, %v1019
          %v1122 = vpack.c.b16 %v1024, %v1022
          %v1123 = vpack.c.b16 %v1025, %v1023
          %v1124 = vpack.c.b16 %v1028, %v1026
          %v1125 = vpack.c.b16 %v1029, %v1027
          %v1126 = vpack.c.b16 %v1032, %v1030
          %v1127 = vpack.c.b16 %v1033, %v1031
          %v1128 = vpack.c.b16 %v1036, %v1034
          %v1129 = vpack.c.b16 %v1037, %v1035
          %v1130 = vpack.c.b16 %v1040, %v1038
          %v1131 = vpack.c.b16 %v1041, %v1039
          %v1132 = vpack.c.b16 %v1044, %v1042
          %v1133 = vpack.c.b16 %v1045, %v1043
          %v1134 = vpack.c.b16 %v1048, %v1046
          %v1135 = vpack.c.b16 %v1049, %v1047
          %v1136 = vpack.c.b16 %v1052, %v1050
          %v1137 = vpack.c.b16 %v1053, %v1051
          %v1138 = vpack.c.b16 %v1056, %v1054
          %v1139 = vpack.c.b16 %v1057, %v1055
          %v1140 = vpack.c.b16 %v1060, %v1058
          %v1141 = vpack.c.b16 %v1061, %v1059
          %v1142 = vpack.c.b16 %v1064, %v1062
          %v1143 = vpack.c.b16 %v1065, %v1063
          %v1144 = vpack.c.b16 %v1068, %v1066
          %v1145 = vpack.c.b16 %v1069, %v1067
          %v1146 = vpack.c.b16 %v1072, %v1070
          %v1147 = vpack.c.b16 %v1073, %v1071
          %v1148 = vpack.c.b16 %v1076, %v1074
          %v1149 = vpack.c.b16 %v1077, %v1075
          %v1150 = vpack.c.b16 %v1080, %v1078
          %v1151 = vpack.c.b16 %v1081, %v1079
          %v1152 = vpack.c.b16 %v1084, %v1082
          %v1153 = vpack.c.b16 %v1085, %v1083
          %v1154 = vpack.c.b16 %v1088, %v1086
          %v1155 = vpack.c.b16 %v1089, %v1087
          %v1156 = vpack.c.b16 %v1092, %v1090
          %v1157 = vpack.c.b16 %v1093, %v1091
          %1222 = vmatpush.bf16.msra.mxu0 %v1108
          %1223 = vmatpush.bf16.msra.mxu0 %v1106
          %1224 = vmatpush.bf16.msra.mxu0 %v1104
          %1225 = vmatpush.bf16.msra.mxu0 %v1102
          %1226 = vmatpush.bf16.msra.mxu0 %v1100
          %1227 = vmatpush.bf16.msra.mxu0 %v1098
          %1228 = vmatpush.bf16.msra.mxu0 %v1096
          %1229 = vmatpush.bf16.msra.mxu0 %v1094
          %1230 = vmatmul.bf16.gmra.mxu0 %v828
          %v1231 = vpop.f32.mrf.mxu0
          %v1232 = vadd.f32 %v898, %v1231
          %v1233 = vpop.f32.mrf.mxu0
          %v1234 = vadd.f32 %v898, %v1233
          %1235 = vdwg.mxu0
          %1236 = vmatpush.bf16.msra.mxu0 %v1124
          %1237 = vmatpush.bf16.msra.mxu0 %v1122
          %1238 = vmatpush.bf16.msra.mxu0 %v1120
          %1239 = vmatpush.bf16.msra.mxu0 %v1118
          %1240 = vmatpush.bf16.msra.mxu0 %v1116
          %1241 = vmatpush.bf16.msra.mxu0 %v1114
          %1242 = vmatpush.bf16.msra.mxu0 %v1112
          %1243 = vmatpush.bf16.msra.mxu0 %v1110
          %1244 = vmatmul.bf16.gmra.mxu0 %v829
          %v1245 = vpop.f32.mrf.mxu0
          %v1246 = vadd.f32 %v1232, %v1245
          %v1247 = vpop.f32.mrf.mxu0
          %v1248 = vadd.f32 %v1234, %v1247
          %1249 = vdwg.mxu0
          %1250 = vmatpush.bf16.msra.mxu0 %v1140
          %1251 = vmatpush.bf16.msra.mxu0 %v1138
          %1252 = vmatpush.bf16.msra.mxu0 %v1136
          %1253 = vmatpush.bf16.msra.mxu0 %v1134
          %1254 = vmatpush.bf16.msra.mxu0 %v1132
          %1255 = vmatpush.bf16.msra.mxu0 %v1130
          %1256 = vmatpush.bf16.msra.mxu0 %v1128
          %1257 = vmatpush.bf16.msra.mxu0 %v1126
          %1258 = vmatmul.bf16.gmra.mxu0 %v830
          %v1259 = vpop.f32.mrf.mxu0
          %v1260 = vadd.f32 %v1246, %v1259
          %v1261 = vpop.f32.mrf.mxu0
          %v1262 = vadd.f32 %v1248, %v1261
          %1263 = vdwg.mxu0
          %1264 = vmatpush.bf16.msra.mxu0 %v1156
          %1265 = vmatpush.bf16.msra.mxu0 %v1154
          %1266 = vmatpush.bf16.msra.mxu0 %v1152
          %1267 = vmatpush.bf16.msra.mxu0 %v1150
          %1268 = vmatpush.bf16.msra.mxu0 %v1148
          %1269 = vmatpush.bf16.msra.mxu0 %v1146
          %1270 = vmatpush.bf16.msra.mxu0 %v1144
          %1271 = vmatpush.bf16.msra.mxu0 %v1142
          %1272 = vmatmul.bf16.gmra.mxu0 %v831
          %v1273 = vpop.f32.mrf.mxu0
          %v1274 = vadd.f32 %v1260, %v1273
          %v1275 = vpop.f32.mrf.mxu0
          %v1276 = vadd.f32 %v1262, %v1275
          %1277 = vdwg.mxu0
          %1278 = vmatpush.bf16.msra.mxu0 %v1109
          %1279 = vmatpush.bf16.msra.mxu0 %v1107
          %1280 = vmatpush.bf16.msra.mxu0 %v1105
          %1281 = vmatpush.bf16.msra.mxu0 %v1103
          %1282 = vmatpush.bf16.msra.mxu0 %v1101
          %1283 = vmatpush.bf16.msra.mxu0 %v1099
          %1284 = vmatpush.bf16.msra.mxu0 %v1097
          %1285 = vmatpush.bf16.msra.mxu0 %v1095
          %1286 = vmatmul.bf16.gmra.mxu0 %v828
          %v1287 = vpop.f32.mrf.mxu0
          %v1288 = vadd.f32 %v899, %v1287
          %v1289 = vpop.f32.mrf.mxu0
          %v1290 = vadd.f32 %v899, %v1289
          %1291 = vdwg.mxu0
          %1292 = vmatpush.bf16.msra.mxu0 %v1125
          %1293 = vmatpush.bf16.msra.mxu0 %v1123
          %1294 = vmatpush.bf16.msra.mxu0 %v1121
          %1295 = vmatpush.bf16.msra.mxu0 %v1119
          %1296 = vmatpush.bf16.msra.mxu0 %v1117
          %1297 = vmatpush.bf16.msra.mxu0 %v1115
          %1298 = vmatpush.bf16.msra.mxu0 %v1113
          %1299 = vmatpush.bf16.msra.mxu0 %v1111
          %1300 = vmatmul.bf16.gmra.mxu0 %v829
          %v1301 = vpop.f32.mrf.mxu0
          %v1302 = vadd.f32 %v1288, %v1301
          %v1303 = vpop.f32.mrf.mxu0
          %v1304 = vadd.f32 %v1290, %v1303
          %1305 = vdwg.mxu0
          %1306 = vmatpush.bf16.msra.mxu0 %v1141
          %1307 = vmatpush.bf16.msra.mxu0 %v1139
          %1308 = vmatpush.bf16.msra.mxu0 %v1137
          %1309 = vmatpush.bf16.msra.mxu0 %v1135
          %1310 = vmatpush.bf16.msra.mxu0 %v1133
          %1311 = vmatpush.bf16.msra.mxu0 %v1131
          %1312 = vmatpush.bf16.msra.mxu0 %v1129
          %1313 = vmatpush.bf16.msra.mxu0 %v1127
          %1314 = vmatmul.bf16.gmra.mxu0 %v830
          %v1315 = vpop.f32.mrf.mxu0
          %v1316 = vadd.f32 %v1302, %v1315
          %v1317 = vpop.f32.mrf.mxu0
          %v1318 = vadd.f32 %v1304, %v1317
          %1319 = vdwg.mxu0
          %1320 = vmatpush.bf16.msra.mxu0 %v1157
          %1321 = vmatpush.bf16.msra.mxu0 %v1155
          %1322 = vmatpush.bf16.msra.mxu0 %v1153
          %1323 = vmatpush.bf16.msra.mxu0 %v1151
          %1324 = vmatpush.bf16.msra.mxu0 %v1149
          %1325 = vmatpush.bf16.msra.mxu0 %v1147
          %1326 = vmatpush.bf16.msra.mxu0 %v1145
          %1327 = vmatpush.bf16.msra.mxu0 %v1143
          %1328 = vmatmul.bf16.gmra.mxu0 %v831
          %v1329 = vpop.f32.mrf.mxu0
          %v1330 = vadd.f32 %v1316, %v1329
          %v1331 = vpop.f32.mrf.mxu0
          %v1332 = vadd.f32 %v1318, %v1331
          %1333 = vdwg.mxu0
          %v1334 = vmax.f32 %v1274, 0.0
          %v1335 = vmax.f32 %v1330, 0.0
          %v1336 = vmax.f32 %v1276, 0.0
          %v1337 = vmax.f32 %v1332, 0.0
          %v1338 = vmul.f32 %v1334, %v513
          %v1339 = vmul.f32 %v1335, %v513
          %v1340 = vmul.f32 %v1336, %v514
          %v1341 = vmul.f32 %v1337, %v514
          %v1342 = vld [vmem:[#allocation4] sm:$0x3]
          %v1343 = vadd.f32 %v1338, %v1340
          %v1344 = vrot.slane %v1343, 4
          %v1345 = vadd.f32 %v1343, %v1344
          %v1346 = vrot.slane %v1345, 2
          %v1347 = vadd.f32 %v1345, %v1346
          %v1348 = vrot.slane %v1347, 1
          %v1349 = vadd.f32 %v1347, %v1348
          %v1350 = vadd.f32 %v1339, %v1341
          %v1351 = vrot.slane %v1350, 4
          %v1352 = vadd.f32 %v1350, %v1351
          %v1353 = vrot.slane %v1352, 2
          %v1354 = vadd.f32 %v1352, %v1353
          %v1355 = vrot.slane %v1354, 1
          %v1356 = vadd.f32 %v1354, %v1355
          %v1359 = vrot.slane %v1356, 7
          %vm1360 = vcmask 1040384
          %v1361 = vsel %vm1360, %v1349, %v1359
          %v1363 = vadd.f32 %v1342, %v1361
          %v1364 = vlaneseq
          %vm1365 = vcmp.ge.s32.totalorder %v1364, 0
          %vm1366 = vcmp.lt.s32.totalorder %v1364, 256
          %vm1367 = vmand %vm1365, %vm1366
          %1368 = vst.msk [vmem:[#allocation4] sm:$0x3] %vm1367, %v1363
          %v1369 = vld [vmem:[#allocation5] sm:$0x3]
          %v1370 = vmul.f32 %v1338, %v1334
          %v1371 = vmul.f32 %v1339, %v1335
          %v1372 = vmul.f32 %v1340, %v1336
          %v1373 = vmul.f32 %v1341, %v1337
          %v1374 = vadd.f32 %v1370, %v1372
          %v1375 = vrot.slane %v1374, 4
          %v1376 = vadd.f32 %v1374, %v1375
          %v1377 = vrot.slane %v1376, 2
          %v1378 = vadd.f32 %v1376, %v1377
          %v1379 = vrot.slane %v1378, 1
          %v1380 = vadd.f32 %v1378, %v1379
          %v1381 = vadd.f32 %v1371, %v1373
          %v1382 = vrot.slane %v1381, 4
          %v1383 = vadd.f32 %v1381, %v1382
          %v1384 = vrot.slane %v1383, 2
          %v1385 = vadd.f32 %v1383, %v1384
          %v1386 = vrot.slane %v1385, 1
          %v1387 = vadd.f32 %v1385, %v1386
          %v1390 = vrot.slane %v1387, 7
          %v1391 = vsel %vm1360, %v1380, %v1390
          %v1393 = vadd.f32 %v1369, %v1391
          %1394 = vst.msk [vmem:[#allocation5] sm:$0x3] %vm1367, %v1393
          %vm1395 = vcmask 7168
          %1396 = vst.msk [vmem:[%s483] sm:$0xff] %vm1395, 0.0
          %1397 = vst.msk [vmem:[%s483 + $0x8] sm:$0xff] %vm1395, 0.0
        $region104: #{tpu_custom_call.1} parent=63 // pred_fallthru
          _
        %p1398 = pnand %p788, %p487
        %p1399 = pneg %p1398
        // Predicated region
        $region105: #{tpu_custom_call.1} parent=63 // pred_check
          _
        $region106: #{tpu_custom_call.1} parent=63 // pred_check_branch
          %1401 = sbr.rel (%p1398) target = $region108
        $region107: #{tpu_custom_call.1} parent=63 // pred_region
          %v1402 = vld [vmem:[#allocation4] sm:$0x3]
          %v1403 = vmul.f32 %v1402, 0.125
          %v1404 = vld [vmem:[#allocation5] sm:$0x3]
          %v1405 = vmul.f32 %v1404, 0.125
          %v1406 = vmul.f32 %v1403, %v1403
          %v1407 = vsub.f32 %v1405, %v1406
          %v1408 = vmax.f32 %v1407, 0.0
          %v1409 = vld [vmem:[%s7] sm:$0x3]
          %v1410 = vadd.f32 %v1408, 1e-05
          %v1411 = vrsqrt.pop %v1410
          %v1412 = vmul.f32 %v1411, %v1410
          %v1413 = vmul.f32 %v1412, %v1411
          %v1414 = vmul.f32 0.5, %v1413
          %v1415 = vsub.f32 1.5, %v1414
          %v1416 = vmul.f32 %v1411, %v1415
          %vm1417 = vweird.f32 %v1410
          %vm1418 = vweird.f32 %v1411
          %vm1419 = vmor %vm1417, %vm1418
          %v1420 = vsel %vm1419, %v1411, %v1416
          %v1421 = vmul.f32 %v1409, %v1420
          %v1422 = vlaneseq
          %vm1423 = vcmp.ge.s32.totalorder %v1422, 0
          %vm1424 = vcmp.lt.s32.totalorder %v1422, 256
          %vm1425 = vmand %vm1423, %vm1424
          %1426 = vst.msk [vmem:[#allocation8] sm:$0x3] %vm1425, %v1421
          %v1427 = vld [vmem:[#allocation19] sm:$0x3]
          %v1428 = vmul.f32 %v1403, %v1421
          %v1429 = vsub.f32 %v1427, %v1428
          %1430 = vst.msk [vmem:[#allocation9] sm:$0x3] %vm1425, %v1429
        $region108: #{tpu_custom_call.1} parent=63 // pred_fallthru
          _
        %p1431 = scmp.eq.s32.totalorder %s32, 2
        // Predicated region
        $region109: #{tpu_custom_call.1} parent=63 // pred_check
          %p1432 = pneg %p1431
        $region110: #{tpu_custom_call.1} parent=63 // pred_check_branch
          %1434 = sbr.rel (%p1432) target = $region112
        $region111: #{tpu_custom_call.1} parent=63 // pred_region
          %v1435 = vld [vmem:[#allocation6] sm:$0xf]
          %v1437 = vperm.slane %v1435, 0
          %v1438 = vperm.slane %v1435, 1
          %v1439 = vperm.slane %v1435, 2
          %v1440 = vperm.slane %v1435, 3
          %v1445 = vmul.f32 %v636, %v1437
          %v1446 = vmul.f32 %v637, %v1438
          %v1447 = vmul.f32 %v638, %v1439
          %v1448 = vmul.f32 %v639, %v1440
          %v1449 = vmul.f32 %v640, %v1437
          %v1450 = vmul.f32 %v641, %v1438
          %v1451 = vmul.f32 %v642, %v1439
          %v1452 = vmul.f32 %v643, %v1440
          %v1453 = vld [vmem:[#allocation7] sm:$0xf]
          %v1455 = vperm.slane %v1453, 0
          %v1456 = vperm.slane %v1453, 1
          %v1457 = vperm.slane %v1453, 2
          %v1458 = vperm.slane %v1453, 3
          %v1463 = vadd.f32 %v1445, %v1455
          %v1464 = vadd.f32 %v1446, %v1456
          %v1465 = vadd.f32 %v1447, %v1457
          %v1466 = vadd.f32 %v1448, %v1458
          %v1467 = vadd.f32 %v1449, %v1455
          %v1468 = vadd.f32 %v1450, %v1456
          %v1469 = vadd.f32 %v1451, %v1457
          %v1470 = vadd.f32 %v1452, %v1458
          %v1471 = vpack.c.bf16 %v1467, %v1463
          %v1472 = vpack.c.bf16 %v1468, %v1464
          %v1473 = vpack.c.bf16 %v1469, %v1465
          %v1474 = vpack.c.bf16 %v1470, %v1466
          %v1475 = vld [vmem:[#allocation18] sm:$0xff]
          %v1476 = vld [vmem:[#allocation18 + $0x8] sm:$0xff]
          %v1477 = vld [vmem:[#allocation18 + $0x10] sm:$0xff]
          %v1478 = vld [vmem:[#allocation18 + $0x18] sm:$0xff]
          %v1479 = vld [vmem:[#allocation18 + $0x20] sm:$0xff]
          %v1480 = vld [vmem:[#allocation18 + $0x28] sm:$0xff]
          %v1481 = vld [vmem:[#allocation18 + $0x30] sm:$0xff]
          %v1482 = vld [vmem:[#allocation18 + $0x38] sm:$0xff]
          %v1483 = vld [vmem:[#allocation18 + $0x40] sm:$0xff]
          %v1484 = vld [vmem:[#allocation18 + $0x48] sm:$0xff]
          %v1485 = vld [vmem:[#allocation18 + $0x50] sm:$0xff]
          %v1486 = vld [vmem:[#allocation18 + $0x58] sm:$0xff]
          %v1487 = vld [vmem:[#allocation18 + $0x60] sm:$0xff]
          %v1488 = vld [vmem:[#allocation18 + $0x68] sm:$0xff]
          %v1489 = vld [vmem:[#allocation18 + $0x70] sm:$0xff]
          %v1490 = vld [vmem:[#allocation18 + $0x78] sm:$0xff]
          %v1491 = vld [vmem:[#allocation18 + $0x80] sm:$0xff]
          %v1492 = vld [vmem:[#allocation18 + $0x88] sm:$0xff]
          %v1493 = vld [vmem:[#allocation18 + $0x90] sm:$0xff]
          %v1494 = vld [vmem:[#allocation18 + $0x98] sm:$0xff]
          %v1495 = vld [vmem:[#allocation18 + $0xa0] sm:$0xff]
          %v1496 = vld [vmem:[#allocation18 + $0xa8] sm:$0xff]
          %v1497 = vld [vmem:[#allocation18 + $0xb0] sm:$0xff]
          %v1498 = vld [vmem:[#allocation18 + $0xb8] sm:$0xff]
          %v1499 = vld [vmem:[#allocation18 + $0xc0] sm:$0xff]
          %v1500 = vld [vmem:[#allocation18 + $0xc8] sm:$0xff]
          %v1501 = vld [vmem:[#allocation18 + $0xd0] sm:$0xff]
          %v1502 = vld [vmem:[#allocation18 + $0xd8] sm:$0xff]
          %v1503 = vld [vmem:[#allocation18 + $0xe0] sm:$0xff]
          %v1504 = vld [vmem:[#allocation18 + $0xe8] sm:$0xff]
          %v1505 = vld [vmem:[#allocation18 + $0xf0] sm:$0xff]
          %v1506 = vld [vmem:[#allocation18 + $0xf8] sm:$0xff]
          %v1507 = vld [vmem:[#allocation18 + $0x100] sm:$0xff]
          %v1508 = vld [vmem:[#allocation18 + $0x108] sm:$0xff]
          %v1509 = vld [vmem:[#allocation18 + $0x110] sm:$0xff]
          %v1510 = vld [vmem:[#allocation18 + $0x118] sm:$0xff]
          %v1511 = vld [vmem:[#allocation18 + $0x120] sm:$0xff]
          %v1512 = vld [vmem:[#allocation18 + $0x128] sm:$0xff]
          %v1513 = vld [vmem:[#allocation18 + $0x130] sm:$0xff]
          %v1514 = vld [vmem:[#allocation18 + $0x138] sm:$0xff]
          %v1515 = vld [vmem:[#allocation18 + $0x140] sm:$0xff]
          %v1516 = vld [vmem:[#allocation18 + $0x148] sm:$0xff]
          %v1517 = vld [vmem:[#allocation18 + $0x150] sm:$0xff]
          %v1518 = vld [vmem:[#allocation18 + $0x158] sm:$0xff]
          %v1519 = vld [vmem:[#allocation18 + $0x160] sm:$0xff]
          %v1520 = vld [vmem:[#allocation18 + $0x168] sm:$0xff]
          %v1521 = vld [vmem:[#allocation18 + $0x170] sm:$0xff]
          %v1522 = vld [vmem:[#allocation18 + $0x178] sm:$0xff]
          %v1523 = vld [vmem:[#allocation18 + $0x180] sm:$0xff]
          %v1524 = vld [vmem:[#allocation18 + $0x188] sm:$0xff]
          %v1525 = vld [vmem:[#allocation18 + $0x190] sm:$0xff]
          %v1526 = vld [vmem:[#allocation18 + $0x198] sm:$0xff]
          %v1527 = vld [vmem:[#allocation18 + $0x1a0] sm:$0xff]
          %v1528 = vld [vmem:[#allocation18 + $0x1a8] sm:$0xff]
          %v1529 = vld [vmem:[#allocation18 + $0x1b0] sm:$0xff]
          %v1530 = vld [vmem:[#allocation18 + $0x1b8] sm:$0xff]
          %v1531 = vld [vmem:[#allocation18 + $0x1c0] sm:$0xff]
          %v1532 = vld [vmem:[#allocation18 + $0x1c8] sm:$0xff]
          %v1533 = vld [vmem:[#allocation18 + $0x1d0] sm:$0xff]
          %v1534 = vld [vmem:[#allocation18 + $0x1d8] sm:$0xff]
          %v1535 = vld [vmem:[#allocation18 + $0x1e0] sm:$0xff]
          %v1536 = vld [vmem:[#allocation18 + $0x1e8] sm:$0xff]
          %v1537 = vld [vmem:[#allocation18 + $0x1f0] sm:$0xff]
          %v1538 = vld [vmem:[#allocation18 + $0x1f8] sm:$0xff]
          %v1539 = vld [vmem:[%s6] sm:$0x3]
          %v1541 = vperm.slane %v1539, 0
          %v1542 = vperm.slane %v1539, 1
          %v1609 = vunpack.c.l.b16 %v1475
          %v1610 = vunpack.c.h.b16 %v1475
          %v1611 = vunpack.c.l.b16 %v1476
          %v1612 = vunpack.c.h.b16 %v1476
          %v1613 = vunpack.c.l.b16 %v1477
          %v1614 = vunpack.c.h.b16 %v1477
          %v1615 = vunpack.c.l.b16 %v1478
          %v1616 = vunpack.c.h.b16 %v1478
          %v1617 = vunpack.c.l.b16 %v1479
          %v1618 = vunpack.c.h.b16 %v1479
          %v1619 = vunpack.c.l.b16 %v1480
          %v1620 = vunpack.c.h.b16 %v1480
          %v1621 = vunpack.c.l.b16 %v1481
          %v1622 = vunpack.c.h.b16 %v1481
          %v1623 = vunpack.c.l.b16 %v1482
          %v1624 = vunpack.c.h.b16 %v1482
          %v1625 = vunpack.c.l.b16 %v1483
          %v1626 = vunpack.c.h.b16 %v1483
          %v1627 = vunpack.c.l.b16 %v1484
          %v1628 = vunpack.c.h.b16 %v1484
          %v1629 = vunpack.c.l.b16 %v1485
          %v1630 = vunpack.c.h.b16 %v1485
          %v1631 = vunpack.c.l.b16 %v1486
          %v1632 = vunpack.c.h.b16 %v1486
          %v1633 = vunpack.c.l.b16 %v1487
          %v1634 = vunpack.c.h.b16 %v1487
          %v1635 = vunpack.c.l.b16 %v1488
          %v1636 = vunpack.c.h.b16 %v1488
          %v1637 = vunpack.c.l.b16 %v1489
          %v1638 = vunpack.c.h.b16 %v1489
          %v1639 = vunpack.c.l.b16 %v1490
          %v1640 = vunpack.c.h.b16 %v1490
          %v1641 = vunpack.c.l.b16 %v1491
          %v1642 = vunpack.c.h.b16 %v1491
          %v1643 = vunpack.c.l.b16 %v1492
          %v1644 = vunpack.c.h.b16 %v1492
          %v1645 = vunpack.c.l.b16 %v1493
          %v1646 = vunpack.c.h.b16 %v1493
          %v1647 = vunpack.c.l.b16 %v1494
          %v1648 = vunpack.c.h.b16 %v1494
          %v1649 = vunpack.c.l.b16 %v1495
          %v1650 = vunpack.c.h.b16 %v1495
          %v1651 = vunpack.c.l.b16 %v1496
          %v1652 = vunpack.c.h.b16 %v1496
          %v1653 = vunpack.c.l.b16 %v1497
          %v1654 = vunpack.c.h.b16 %v1497
          %v1655 = vunpack.c.l.b16 %v1498
          %v1656 = vunpack.c.h.b16 %v1498
          %v1657 = vunpack.c.l.b16 %v1499
          %v1658 = vunpack.c.h.b16 %v1499
          %v1659 = vunpack.c.l.b16 %v1500
          %v1660 = vunpack.c.h.b16 %v1500
          %v1661 = vunpack.c.l.b16 %v1501
          %v1662 = vunpack.c.h.b16 %v1501
          %v1663 = vunpack.c.l.b16 %v1502
          %v1664 = vunpack.c.h.b16 %v1502
          %v1665 = vunpack.c.l.b16 %v1503
          %v1666 = vunpack.c.h.b16 %v1503
          %v1667 = vunpack.c.l.b16 %v1504
          %v1668 = vunpack.c.h.b16 %v1504
          %v1669 = vunpack.c.l.b16 %v1505
          %v1670 = vunpack.c.h.b16 %v1505
          %v1671 = vunpack.c.l.b16 %v1506
          %v1672 = vunpack.c.h.b16 %v1506
          %v1673 = vunpack.c.l.b16 %v1507
          %v1674 = vunpack.c.h.b16 %v1507
          %v1675 = vunpack.c.l.b16 %v1508
          %v1676 = vunpack.c.h.b16 %v1508
          %v1677 = vunpack.c.l.b16 %v1509
          %v1678 = vunpack.c.h.b16 %v1509
          %v1679 = vunpack.c.l.b16 %v1510
          %v1680 = vunpack.c.h.b16 %v1510
          %v1681 = vunpack.c.l.b16 %v1511
          %v1682 = vunpack.c.h.b16 %v1511
          %v1683 = vunpack.c.l.b16 %v1512
          %v1684 = vunpack.c.h.b16 %v1512
          %v1685 = vunpack.c.l.b16 %v1513
          %v1686 = vunpack.c.h.b16 %v1513
          %v1687 = vunpack.c.l.b16 %v1514
          %v1688 = vunpack.c.h.b16 %v1514
          %v1689 = vunpack.c.l.b16 %v1515
          %v1690 = vunpack.c.h.b16 %v1515
          %v1691 = vunpack.c.l.b16 %v1516
          %v1692 = vunpack.c.h.b16 %v1516
          %v1693 = vunpack.c.l.b16 %v1517
          %v1694 = vunpack.c.h.b16 %v1517
          %v1695 = vunpack.c.l.b16 %v1518
          %v1696 = vunpack.c.h.b16 %v1518
          %v1697 = vunpack.c.l.b16 %v1519
          %v1698 = vunpack.c.h.b16 %v1519
          %v1699 = vunpack.c.l.b16 %v1520
          %v1700 = vunpack.c.h.b16 %v1520
          %v1701 = vunpack.c.l.b16 %v1521
          %v1702 = vunpack.c.h.b16 %v1521
          %v1703 = vunpack.c.l.b16 %v1522
          %v1704 = vunpack.c.h.b16 %v1522
          %v1705 = vunpack.c.l.b16 %v1523
          %v1706 = vunpack.c.h.b16 %v1523
          %v1707 = vunpack.c.l.b16 %v1524
          %v1708 = vunpack.c.h.b16 %v1524
          %v1709 = vunpack.c.l.b16 %v1525
          %v1710 = vunpack.c.h.b16 %v1525
          %v1711 = vunpack.c.l.b16 %v1526
          %v1712 = vunpack.c.h.b16 %v1526
          %v1713 = vunpack.c.l.b16 %v1527
          %v1714 = vunpack.c.h.b16 %v1527
          %v1715 = vunpack.c.l.b16 %v1528
          %v1716 = vunpack.c.h.b16 %v1528
          %v1717 = vunpack.c.l.b16 %v1529
          %v1718 = vunpack.c.h.b16 %v1529
          %v1719 = vunpack.c.l.b16 %v1530
          %v1720 = vunpack.c.h.b16 %v1530
          %v1721 = vunpack.c.l.b16 %v1531
          %v1722 = vunpack.c.h.b16 %v1531
          %v1723 = vunpack.c.l.b16 %v1532
          %v1724 = vunpack.c.h.b16 %v1532
          %v1725 = vunpack.c.l.b16 %v1533
          %v1726 = vunpack.c.h.b16 %v1533
          %v1727 = vunpack.c.l.b16 %v1534
          %v1728 = vunpack.c.h.b16 %v1534
          %v1729 = vunpack.c.l.b16 %v1535
          %v1730 = vunpack.c.h.b16 %v1535
          %v1731 = vunpack.c.l.b16 %v1536
          %v1732 = vunpack.c.h.b16 %v1536
          %v1733 = vunpack.c.l.b16 %v1537
          %v1734 = vunpack.c.h.b16 %v1537
          %v1735 = vunpack.c.l.b16 %v1538
          %v1736 = vunpack.c.h.b16 %v1538
          %v1737 = vpack.c.b16 %v1611, %v1609
          %v1738 = vpack.c.b16 %v1612, %v1610
          %v1739 = vpack.c.b16 %v1615, %v1613
          %v1740 = vpack.c.b16 %v1616, %v1614
          %v1741 = vpack.c.b16 %v1619, %v1617
          %v1742 = vpack.c.b16 %v1620, %v1618
          %v1743 = vpack.c.b16 %v1623, %v1621
          %v1744 = vpack.c.b16 %v1624, %v1622
          %v1745 = vpack.c.b16 %v1627, %v1625
          %v1746 = vpack.c.b16 %v1628, %v1626
          %v1747 = vpack.c.b16 %v1631, %v1629
          %v1748 = vpack.c.b16 %v1632, %v1630
          %v1749 = vpack.c.b16 %v1635, %v1633
          %v1750 = vpack.c.b16 %v1636, %v1634
          %v1751 = vpack.c.b16 %v1639, %v1637
          %v1752 = vpack.c.b16 %v1640, %v1638
          %v1753 = vpack.c.b16 %v1643, %v1641
          %v1754 = vpack.c.b16 %v1644, %v1642
          %v1755 = vpack.c.b16 %v1647, %v1645
          %v1756 = vpack.c.b16 %v1648, %v1646
          %v1757 = vpack.c.b16 %v1651, %v1649
          %v1758 = vpack.c.b16 %v1652, %v1650
          %v1759 = vpack.c.b16 %v1655, %v1653
          %v1760 = vpack.c.b16 %v1656, %v1654
          %v1761 = vpack.c.b16 %v1659, %v1657
          %v1762 = vpack.c.b16 %v1660, %v1658
          %v1763 = vpack.c.b16 %v1663, %v1661
          %v1764 = vpack.c.b16 %v1664, %v1662
          %v1765 = vpack.c.b16 %v1667, %v1665
          %v1766 = vpack.c.b16 %v1668, %v1666
          %v1767 = vpack.c.b16 %v1671, %v1669
          %v1768 = vpack.c.b16 %v1672, %v1670
          %v1769 = vpack.c.b16 %v1675, %v1673
          %v1770 = vpack.c.b16 %v1676, %v1674
          %v1771 = vpack.c.b16 %v1679, %v1677
          %v1772 = vpack.c.b16 %v1680, %v1678
          %v1773 = vpack.c.b16 %v1683, %v1681
          %v1774 = vpack.c.b16 %v1684, %v1682
          %v1775 = vpack.c.b16 %v1687, %v1685
          %v1776 = vpack.c.b16 %v1688, %v1686
          %v1777 = vpack.c.b16 %v1691, %v1689
          %v1778 = vpack.c.b16 %v1692, %v1690
          %v1779 = vpack.c.b16 %v1695, %v1693
          %v1780 = vpack.c.b16 %v1696, %v1694
          %v1781 = vpack.c.b16 %v1699, %v1697
          %v1782 = vpack.c.b16 %v1700, %v1698
          %v1783 = vpack.c.b16 %v1703, %v1701
          %v1784 = vpack.c.b16 %v1704, %v1702
          %v1785 = vpack.c.b16 %v1707, %v1705
          %v1786 = vpack.c.b16 %v1708, %v1706
          %v1787 = vpack.c.b16 %v1711, %v1709
          %v1788 = vpack.c.b16 %v1712, %v1710
          %v1789 = vpack.c.b16 %v1715, %v1713
          %v1790 = vpack.c.b16 %v1716, %v1714
          %v1791 = vpack.c.b16 %v1719, %v1717
          %v1792 = vpack.c.b16 %v1720, %v1718
          %v1793 = vpack.c.b16 %v1723, %v1721
          %v1794 = vpack.c.b16 %v1724, %v1722
          %v1795 = vpack.c.b16 %v1727, %v1725
          %v1796 = vpack.c.b16 %v1728, %v1726
          %v1797 = vpack.c.b16 %v1731, %v1729
          %v1798 = vpack.c.b16 %v1732, %v1730
          %v1799 = vpack.c.b16 %v1735, %v1733
          %v1800 = vpack.c.b16 %v1736, %v1734
          %1865 = vmatpush.bf16.msra.mxu0 %v1751
          %1866 = vmatpush.bf16.msra.mxu0 %v1749
          %1867 = vmatpush.bf16.msra.mxu0 %v1747
          %1868 = vmatpush.bf16.msra.mxu0 %v1745
          %1869 = vmatpush.bf16.msra.mxu0 %v1743
          %1870 = vmatpush.bf16.msra.mxu0 %v1741
          %1871 = vmatpush.bf16.msra.mxu0 %v1739
          %1872 = vmatpush.bf16.msra.mxu0 %v1737
          %1873 = vmatmul.bf16.gmra.mxu0 %v1471
          %v1874 = vpop.f32.mrf.mxu0
          %v1875 = vadd.f32 %v1541, %v1874
          %v1876 = vpop.f32.mrf.mxu0
          %v1877 = vadd.f32 %v1541, %v1876
          %1878 = vdwg.mxu0
          %1879 = vmatpush.bf16.msra.mxu0 %v1767
          %1880 = vmatpush.bf16.msra.mxu0 %v1765
          %1881 = vmatpush.bf16.msra.mxu0 %v1763
          %1882 = vmatpush.bf16.msra.mxu0 %v1761
          %1883 = vmatpush.bf16.msra.mxu0 %v1759
          %1884 = vmatpush.bf16.msra.mxu0 %v1757
          %1885 = vmatpush.bf16.msra.mxu0 %v1755
          %1886 = vmatpush.bf16.msra.mxu0 %v1753
          %1887 = vmatmul.bf16.gmra.mxu0 %v1472
          %v1888 = vpop.f32.mrf.mxu0
          %v1889 = vadd.f32 %v1875, %v1888
          %v1890 = vpop.f32.mrf.mxu0
          %v1891 = vadd.f32 %v1877, %v1890
          %1892 = vdwg.mxu0
          %1893 = vmatpush.bf16.msra.mxu0 %v1783
          %1894 = vmatpush.bf16.msra.mxu0 %v1781
          %1895 = vmatpush.bf16.msra.mxu0 %v1779
          %1896 = vmatpush.bf16.msra.mxu0 %v1777
          %1897 = vmatpush.bf16.msra.mxu0 %v1775
          %1898 = vmatpush.bf16.msra.mxu0 %v1773
          %1899 = vmatpush.bf16.msra.mxu0 %v1771
          %1900 = vmatpush.bf16.msra.mxu0 %v1769
          %1901 = vmatmul.bf16.gmra.mxu0 %v1473
          %v1902 = vpop.f32.mrf.mxu0
          %v1903 = vadd.f32 %v1889, %v1902
          %v1904 = vpop.f32.mrf.mxu0
          %v1905 = vadd.f32 %v1891, %v1904
          %1906 = vdwg.mxu0
          %1907 = vmatpush.bf16.msra.mxu0 %v1799
          %1908 = vmatpush.bf16.msra.mxu0 %v1797
          %1909 = vmatpush.bf16.msra.mxu0 %v1795
          %1910 = vmatpush.bf16.msra.mxu0 %v1793
          %1911 = vmatpush.bf16.msra.mxu0 %v1791
          %1912 = vmatpush.bf16.msra.mxu0 %v1789
          %1913 = vmatpush.bf16.msra.mxu0 %v1787
          %1914 = vmatpush.bf16.msra.mxu0 %v1785
          %1915 = vmatmul.bf16.gmra.mxu0 %v1474
          %v1916 = vpop.f32.mrf.mxu0
          %v1917 = vadd.f32 %v1903, %v1916
          %v1918 = vpop.f32.mrf.mxu0
          %v1919 = vadd.f32 %v1905, %v1918
          %1920 = vdwg.mxu0
          %1921 = vmatpush.bf16.msra.mxu0 %v1752
          %1922 = vmatpush.bf16.msra.mxu0 %v1750
          %1923 = vmatpush.bf16.msra.mxu0 %v1748
          %1924 = vmatpush.bf16.msra.mxu0 %v1746
          %1925 = vmatpush.bf16.msra.mxu0 %v1744
          %1926 = vmatpush.bf16.msra.mxu0 %v1742
          %1927 = vmatpush.bf16.msra.mxu0 %v1740
          %1928 = vmatpush.bf16.msra.mxu0 %v1738
          %1929 = vmatmul.bf16.gmra.mxu0 %v1471
          %v1930 = vpop.f32.mrf.mxu0
          %v1931 = vadd.f32 %v1542, %v1930
          %v1932 = vpop.f32.mrf.mxu0
          %v1933 = vadd.f32 %v1542, %v1932
          %1934 = vdwg.mxu0
          %1935 = vmatpush.bf16.msra.mxu0 %v1768
          %1936 = vmatpush.bf16.msra.mxu0 %v1766
          %1937 = vmatpush.bf16.msra.mxu0 %v1764
          %1938 = vmatpush.bf16.msra.mxu0 %v1762
          %1939 = vmatpush.bf16.msra.mxu0 %v1760
          %1940 = vmatpush.bf16.msra.mxu0 %v1758
          %1941 = vmatpush.bf16.msra.mxu0 %v1756
          %1942 = vmatpush.bf16.msra.mxu0 %v1754
          %1943 = vmatmul.bf16.gmra.mxu0 %v1472
          %v1944 = vpop.f32.mrf.mxu0
          %v1945 = vadd.f32 %v1931, %v1944
          %v1946 = vpop.f32.mrf.mxu0
          %v1947 = vadd.f32 %v1933, %v1946
          %1948 = vdwg.mxu0
          %1949 = vmatpush.bf16.msra.mxu0 %v1784
          %1950 = vmatpush.bf16.msra.mxu0 %v1782
          %1951 = vmatpush.bf16.msra.mxu0 %v1780
          %1952 = vmatpush.bf16.msra.mxu0 %v1778
          %1953 = vmatpush.bf16.msra.mxu0 %v1776
          %1954 = vmatpush.bf16.msra.mxu0 %v1774
          %1955 = vmatpush.bf16.msra.mxu0 %v1772
          %1956 = vmatpush.bf16.msra.mxu0 %v1770
          %1957 = vmatmul.bf16.gmra.mxu0 %v1473
          %v1958 = vpop.f32.mrf.mxu0
          %v1959 = vadd.f32 %v1945, %v1958
          %v1960 = vpop.f32.mrf.mxu0
          %v1961 = vadd.f32 %v1947, %v1960
          %1962 = vdwg.mxu0
          %1963 = vmatpush.bf16.msra.mxu0 %v1800
          %1964 = vmatpush.bf16.msra.mxu0 %v1798
          %1965 = vmatpush.bf16.msra.mxu0 %v1796
          %1966 = vmatpush.bf16.msra.mxu0 %v1794
          %1967 = vmatpush.bf16.msra.mxu0 %v1792
          %1968 = vmatpush.bf16.msra.mxu0 %v1790
          %1969 = vmatpush.bf16.msra.mxu0 %v1788
          %1970 = vmatpush.bf16.msra.mxu0 %v1786
          %1971 = vmatmul.bf16.gmra.mxu0 %v1474
          %v1972 = vpop.f32.mrf.mxu0
          %v1973 = vadd.f32 %v1959, %v1972
          %v1974 = vpop.f32.mrf.mxu0
          %v1975 = vadd.f32 %v1961, %v1974
          %1976 = vdwg.mxu0
          %v1977 = vmax.f32 %v1917, 0.0
          %v1978 = vmax.f32 %v1973, 0.0
          %v1979 = vmax.f32 %v1919, 0.0
          %v1980 = vmax.f32 %v1975, 0.0
          %v1981 = vld [vmem:[#allocation8] sm:$0x3]
          %v1983 = vperm.slane %v1981, 0
          %v1984 = vperm.slane %v1981, 1
          %v1987 = vmul.f32 %v1977, %v1983
          %v1988 = vmul.f32 %v1978, %v1984
          %v1989 = vmul.f32 %v1979, %v1983
          %v1990 = vmul.f32 %v1980, %v1984
          %v1991 = vld [vmem:[#allocation9] sm:$0x3]
          %v1993 = vperm.slane %v1991, 0
          %v1994 = vperm.slane %v1991, 1
          %v1997 = vadd.f32 %v1987, %v1993
          %v1998 = vadd.f32 %v1988, %v1994
          %v1999 = vadd.f32 %v1989, %v1993
          %v2000 = vadd.f32 %v1990, %v1994
          %v2001 = vld [vmem:[%s9] sm:$0x3]
          %v2003 = vperm.slane %v2001, 0
          %v2004 = vperm.slane %v2001, 1
          %v2007 = vmul.f32 %v1997, %v2003
          %v2008 = vmul.f32 %v1998, %v2004
          %v2009 = vmul.f32 %v1999, %v2003
          %v2010 = vmul.f32 %v2000, %v2004
          %v2011 = vadd.f32 %v2007, %v2008
          %2012 = vadd.xlane.f32.xlu0 %v2011
          %v2013 = vpop.xlane.xlu0 %2012
          %v2014 = vadd.f32 %v2009, %v2010
          %2015 = vadd.xlane.f32.xlu0 %v2014
          %v2016 = vpop.xlane.xlu0 %2015
          %v2017 = vld [vmem:[#allocation10] sm:$0x1]
          %v2019 = vperm.slane %v2017, 0
          %v2021 = vadd.f32 %v2013, %v2019
          %v2022 = vadd.f32 %v2016, %v2019
          %v2023 = vxor.u32 %v2021, 2147483648
          %v2024 = vxor.u32 %v2022, 2147483648
          %v2025 = vmul.f32 %v2023, 1.442695
          %v2026 = vpow.pop %v2025
          %v2027 = vmul.f32 %v2024, 1.442695
          %v2028 = vpow.pop %v2027
          %v2029 = vadd.f32 %v2026, 1.0
          %v2030 = vadd.f32 %v2028, 1.0
          %v2031 = vrcp.pop %v2029
          %v2032 = vmul.f32 %v2029, %v2031
          %v2033 = vsub.f32 1.0, %v2032
          %v2034 = vmul.f32 %v2031, %v2033
          %v2035 = vadd.f32 %v2031, %v2034
          %vm2036 = vweird.f32 %v2029
          %vm2037 = vweird.f32 %v2031
          %vm2038 = vmor %vm2036, %vm2037
          %v2039 = vsel %vm2038, %v2031, %v2035
          %v2040 = vand.u32 2147483647, %v2029
          %vm2041 = vcmp.eq.f32.partialorder %v2040, 8.507059e+37
          %v2042 = vand.u32 %v2029, 2147483648
          %v2043 = vor.u32 1.1754944e-38, %v2042
          %v2044 = vsel %vm2041, %v2043, %v2039
          %v2045 = vmul.f32 1.0, %v2044
          %v2046 = vrcp.pop %v2030
          %v2047 = vmul.f32 %v2030, %v2046
          %v2048 = vsub.f32 1.0, %v2047
          %v2049 = vmul.f32 %v2046, %v2048
          %v2050 = vadd.f32 %v2046, %v2049
          %vm2051 = vweird.f32 %v2030
          %vm2052 = vweird.f32 %v2046
          %vm2053 = vmor %vm2051, %vm2052
          %v2054 = vsel %vm2053, %v2046, %v2050
          %v2055 = vand.u32 2147483647, %v2030
          %vm2056 = vcmp.eq.f32.partialorder %v2055, 8.507059e+37
          %v2057 = vand.u32 %v2030, 2147483648
          %v2058 = vor.u32 1.1754944e-38, %v2057
          %v2059 = vsel %vm2056, %v2058, %v2054
          %v2060 = vmul.f32 1.0, %v2059
          %vm2061 = vcmask 7168
          %2062 = vst.msk [vmem:[%s483] sm:$0xff] %vm2061, %v2045
          %2063 = vst.msk [vmem:[%s483 + $0x8] sm:$0xff] %vm2061, %v2060
        $region112: #{tpu_custom_call.1} parent=63 // pred_fallthru
          _
        %s2064 = smul.u32 2, %s33
        %p2065 = scmp.lt.s32.totalorder %s2064, 1
        %s2066 = scalar_select %p2065, %s2064, 1
        %s2067 = smul.addr %s2066, 8
        %s2068 = scalar_lea.vmem %s11, %s2067
        // Predicated region
        $region113: #{tpu_custom_call.1} parent=63 // pred_check
          %p2069 = pneg %p294
        $region114: #{tpu_custom_call.1} parent=63 // pred_check_branch
          %2071 = sbr.rel (%p2069) target = $region116
        $region115: #{tpu_custom_call.1} parent=63 // pred_region
          %s2072 = smul.u32 2, %s33
        $region116: #{tpu_custom_call.1} parent=63 // pred_fallthru
          _
        // Predicated region
        $region117: #{tpu_custom_call.1} parent=63 // pred_check
          %p2073 = pneg %p294
        $region118: #{tpu_custom_call.1} parent=63 // pred_check_branch
          %2075 = sbr.rel (%p2073) target = $region120
        $region119: #{tpu_custom_call.1} parent=63 // pred_region
          %s2076 = smul.u32 2, %s33
          %p2077 = scmp.lt.s32.totalorder %s2076, 1
          %s2078 = scalar_select %p2077, %s2076, 1
          %s2079 = smul.addr %s2078, 8
          %s2080 = scalar_lea.vmem %s11, %s2079
        $region120: #{tpu_custom_call.1} parent=63 // pred_fallthru
          _
      $region64: #{tpu_custom_call.1} parent=5 // pred_fallthru
        _
      %p2081 = scmp.le.s32.totalorder 2, %s23
      // Predicated region
      $region121: #{tpu_custom_call.1} parent=5 // pred_check
        %p2082 = pneg %p2081
      $region122: #{tpu_custom_call.1} parent=5 // pred_check_branch
        %2084 = sbr.rel (%p2082) target = $region124
      $region123: #{tpu_custom_call.1} parent=5 // pred_region
        %s2085 = ssub.s32 %s23, 2
      $region124: #{tpu_custom_call.1} parent=5 // pred_fallthru
        _
    $region6: #{tpu_custom_call.1} parent=1 // loop_footer
      %s27 = sadd.s32 1, %s23
    $region7: #{tpu_custom_call.1} parent=1 // loop_footer_branch
      %22 = sbr.rel target = $region3
    $region8: #{tpu_custom_call.1} parent=1 // loop_exit
      _
    %2086 = vsyncpa [#allocation12], 1
    %s2087 = scalar_lea.sflag [#allocation12], 1
    %2088 = vsyncpa %s2087, 1
    %2089 = vsyncpa [#allocation14], 1
    %2090 = vsyncpa [#allocation17], 1
    %2091 = vsyncpa [#allocation20], 1

</llo_original>
